<compile_context>
chip_gen: v5e
topology: v5e:2x2
jax: 0.10.0
libtpu: 0.0.40
codegen_flags: <defaults>
</compile_context>

<pallas_src>
import jax
import jax.numpy as jnp
from jax.experimental import pallas as pl
from jax.experimental.pallas import tpu as pltpu

F32 = jnp.float32
BF16 = jnp.bfloat16

# ----- model hyper-parameters (from the PyTorch module) ----------------------
E = 100                  # word_dims (real)
EP = 128                 # padded word_dims (lane aligned)
OC = 100                 # out_channel of each conv (real)
OCP = 128                # padded out_channel
FILTER_SIZES = (2, 3, 4)
SRP = len(FILTER_SIZES) * OCP   # padded sent_rep_size = 384 (real 300)
H = 256                  # sent_hidden_size
NUM_LAYERS = 2           # sent_num_layers
H2 = 2 * H               # doc_rep_size = 512
LS_PAD = 128             # lane-dense padded label dim
VMEM_LIMIT = 64 * 1024 * 1024


# =============================================================================
# WordCNNEncoder: time-major embedding block, in-kernel 4-tap im2col (leading
# axis slices -> free), single (.,512)@(512,384) MXU matmul, bias + ReLU +
# validity mask + max-pool-over-time fused, bf16 output.
# =============================================================================
def wordcnn_kernel(x_ref, w_ref, b_ref, m_ref, out_ref):
    t_all, tn, ep = x_ref.shape
    tp = t_all - 3
    x = x_ref[...]                                                   # (T_all, tn, 128) bf16
    # in-kernel im2col: tap slices along the leading (untiled) time axis
    xcat = jnp.concatenate([x[k:k + tp] for k in range(4)], axis=-1)  # (Tp, tn, 512)
    y = jnp.dot(xcat.reshape(tp * tn, 4 * ep), w_ref[...],
                preferred_element_type=F32)                          # (Tp*tn, 384) f32
    y = jnp.maximum(y + b_ref[...], 0.0)                             # bias + ReLU
    # 0-masking is max-safe because ReLU output >= 0 (matches torch relu+maxpool)
    y = y.reshape(tp, tn, SRP) * m_ref[...]                          # (Tp, tn, 384)
    out_ref[...] = jnp.max(y, axis=0).astype(out_ref.dtype)          # max-pool over time


def word_cnn_encoder(emb_tm, conv_w, conv_b, tmask, tile_n):
    t_all, n2, ep = emb_tm.shape
    tp = t_all - 3
    return pl.pallas_call(
        wordcnn_kernel,
        grid=(n2 // tile_n,),
        in_specs=[
            pl.BlockSpec((t_all, tile_n, ep), lambda i: (0, i, 0)),
            pl.BlockSpec((4 * ep, SRP), lambda i: (0, 0)),
            pl.BlockSpec((1, SRP), lambda i: (0, 0)),
            pl.BlockSpec((tp, 1, SRP), lambda i: (0, 0, 0)),
        ],
        out_specs=pl.BlockSpec((tile_n, SRP), lambda i: (i, 0)),
        out_shape=jax.ShapeDtypeStruct((n2, SRP), BF16),
        compiler_params=pltpu.CompilerParams(
            dimension_semantics=("parallel",),
            vmem_limit_bytes=VMEM_LIMIT),
    )(emb_tm, conv_w, conv_b, tmask)


# =============================================================================
# SentEncoder: both bidirectional LSTM layers fused in ONE kernel.
# fwd/bwd directions are merged into one recurrence (stacked (2B,H) state);
# the input projection is hoisted out of the loop (bf16 gx scratch); the
# layer-0 activation never leaves VMEM; output hidden is (T, B, 2H) bf16.
# PyTorch gate order (i, f, g, o); b = b_ih + b_hh.
# =============================================================================
def bilstm2_kernel(x0_ref, w0i_ref, w0h_ref, b0_ref, w1i_ref, w1h_ref, b1_ref,
                   hid_ref, gxf_scr, gxb_scr, xl_scr, h_scr, c_scr):
    T, BPk, _ = x0_ref.shape

    def run_layer(x_in_ref, wih_ref, whh_ref, b_ref, out_ref):
        F = x_in_ref.shape[-1]
        # Input projection for ALL timesteps / both directions (2 big matmuls).
        x2 = x_in_ref[...].reshape(T * BPk, F)                       # bf16
        gxf_scr[...] = (jnp.dot(x2, wih_ref[0], preferred_element_type=F32)
                        + b_ref[0]).reshape(T, BPk, 4 * H).astype(BF16)
        gxb_scr[...] = (jnp.dot(x2, wih_ref[1], preferred_element_type=F32)
                        + b_ref[1]).reshape(T, BPk, 4 * H).astype(BF16)
        h_scr[...] = jnp.zeros_like(h_scr)
        c_scr[...] = jnp.zeros_like(c_scr)
        whh_f = whh_ref[0]                                           # (H, 4H) bf16
        whh_b = whh_ref[1]

        def step(t, carry):
            tr = T - 1 - t
            g_f = gxf_scr[t].astype(F32) + jnp.dot(
                h_scr[0:BPk].astype(BF16), whh_f, preferred_element_type=F32)
            g_b = gxb_scr[tr].astype(F32) + jnp.dot(
                h_scr[BPk:2 * BPk].astype(BF16), whh_b, preferred_element_type=F32)
            g = jnp.concatenate([g_f, g_b], axis=0)                  # (2B, 4H) f32
            i_g = jax.nn.sigmoid(g[:, 0 * H:1 * H])
            f_g = jax.nn.sigmoid(g[:, 1 * H:2 * H])
            g_g = jnp.tanh(g[:, 2 * H:3 * H])
            o_g = jax.nn.sigmoid(g[:, 3 * H:4 * H])
            c_new = f_g * c_scr[...] + i_g * g_g
            h_new = o_g * jnp.tanh(c_new)
            c_scr[...] = c_new
            h_scr[...] = h_new
            out_ref[t, :, 0:H] = h_new[0:BPk].astype(BF16)           # forward half
            out_ref[tr, :, H:2 * H] = h_new[BPk:2 * BPk].astype(BF16)  # backward half
            return carry

        jax.lax.fori_loop(0, T, step, 0, unroll=2)

    run_layer(x0_ref, w0i_ref, w0h_ref, b0_ref, xl_scr)      # layer 0 -> VMEM
    run_layer(xl_scr, w1i_ref, w1h_ref, b1_ref, hid_ref)     # layer 1 -> output


def bilstm_stack(x0, params):
    T, BPk, F0 = x0.shape
    return pl.pallas_call(
        bilstm2_kernel,
        grid=(1,),
        in_specs=[
            pl.BlockSpec((T, BPk, F0), lambda i: (0, 0, 0)),
            pl.BlockSpec((2, F0, 4 * H), lambda i: (0, 0, 0)),
            pl.BlockSpec((2, H, 4 * H), lambda i: (0, 0, 0)),
            pl.BlockSpec((2, 1, 4 * H), lambda i: (0, 0, 0)),
            pl.BlockSpec((2, H2, 4 * H), lambda i: (0, 0, 0)),
            pl.BlockSpec((2, H, 4 * H), lambda i: (0, 0, 0)),
            pl.BlockSpec((2, 1, 4 * H), lambda i: (0, 0, 0)),
        ],
        out_specs=pl.BlockSpec((T, BPk, H2), lambda i: (0, 0, 0)),
        out_shape=jax.ShapeDtypeStruct((T, BPk, H2), BF16),
        scratch_shapes=[
            pltpu.VMEM((T, BPk, 4 * H), BF16),   # gx forward
            pltpu.VMEM((T, BPk, 4 * H), BF16),   # gx backward
            pltpu.VMEM((T, BPk, H2), BF16),      # layer-0 output (layer-1 input)
            pltpu.VMEM((2 * BPk, H), F32),       # h (fwd | bwd stacked)
            pltpu.VMEM((2 * BPk, H), F32),       # c
        ],
        compiler_params=pltpu.CompilerParams(
            dimension_semantics=("arbitrary",),
            vmem_limit_bytes=VMEM_LIMIT),
    )(x0, params['l0_wih'], params['l0_whh'], params['l0_b'],
      params['l1_wih'], params['l1_whh'], params['l1_b'])


# =============================================================================
# Sentence masking + Attention + final Linear, fused; consumes the time-major
# bf16 hidden directly; tiled over (padded) batch; logits padded to 128 lanes.
# =============================================================================
def attn_out_kernel(hid_ref, m_ref, w_ref, b_ref, q_ref, wo_ref, bo_ref,
                    logits_ref):
    T, tb, h2 = hid_ref.shape
    mask = m_ref[...]                                              # (T, tb, 1) f32
    hid = hid_ref[...].astype(F32) * mask                          # SentEncoder masking
    key = (jnp.dot(hid.reshape(T * tb, h2).astype(BF16), w_ref[...],
                   preferred_element_type=F32) + b_ref[...])
    key3 = key.reshape(T, tb, h2)
    scores = jnp.sum(key3 * q_ref[...].reshape(1, 1, h2), axis=-1)  # (T, tb)
    m2 = mask[:, :, 0]
    masked = jnp.where(m2 > 0, scores, jnp.float32(-1e32))
    mx = jnp.max(masked, axis=0, keepdims=True)
    e = jnp.exp(masked - mx)
    attn = e / jnp.sum(e, axis=0, keepdims=True)
    attn = jnp.where(m2 > 0, attn, 0.0)
    doc = jnp.sum(attn[:, :, None] * key3, axis=0)                  # (tb, 2H)
    logits_ref[...] = (jnp.dot(doc.astype(BF16), wo_ref[...],
                               preferred_element_type=F32) + bo_ref[...])


def attention_and_output(hid, mask3, params):
    T, BPk, h2 = hid.shape
    tb = 16
    return pl.pallas_call(
        attn_out_kernel,
        grid=(BPk // tb,),
        in_specs=[
            pl.BlockSpec((T, tb, h2), lambda i: (0, i, 0)),
            pl.BlockSpec((T, tb, 1), lambda i: (0, i, 0)),
            pl.BlockSpec((h2, h2), lambda i: (0, 0)),
            pl.BlockSpec((1, h2), lambda i: (0, 0)),
            pl.BlockSpec((1, h2), lambda i: (0, 0)),
            pl.BlockSpec((h2, LS_PAD), lambda i: (0, 0)),
            pl.BlockSpec((1, LS_PAD), lambda i: (0, 0)),
        ],
        out_specs=pl.BlockSpec((tb, LS_PAD), lambda i: (i, 0)),
        out_shape=jax.ShapeDtypeStruct((BPk, LS_PAD), F32),
        compiler_params=pltpu.CompilerParams(
            dimension_semantics=("parallel",),
            vmem_limit_bytes=VMEM_LIMIT),
    )(hid, mask3, params['attn_w'], params['attn_b'], params['attn_q'],
      params['out_w'], params['out_b'])


# =============================================================================
# Full Model.forward
# =============================================================================
def model_forward(params, batch_inputs1, batch_inputs2, batch_masks, label_size):
    B, Dlen, L = batch_inputs1.shape
    BP = ((B + 15) // 16) * 16         # batch padded to a multiple of 16
    Tp = L - 1                         # widest conv output length
    T_all = Tp + 3                     # embedding time rows needed by tap 3

    # ids arranged (doc_pos, batch) with padded batch rows = 0 (padding_idx).
    ids1 = jnp.pad(jnp.transpose(batch_inputs1, (1, 0, 2)),
                   ((0, 0), (0, BP - B), (0, 0)))                    # (Dlen, BP, L)
    ids2 = jnp.pad(jnp.transpose(batch_inputs2, (1, 0, 2)),
                   ((0, 0), (0, BP - B), (0, 0)))
    N2 = Dlen * BP

    # Embeddings gathered directly in time-major layout (no XLA transpose of
    # the big activation): (L, Dlen, BP, 128) -> (T_all, N2, 128) bf16.
    ids1_t = jnp.transpose(ids1, (2, 0, 1))
    ids2_t = jnp.transpose(ids2, (2, 0, 1))
    emb = (jnp.take(params['word_embed'], ids1_t, axis=0)
           + jnp.take(params['extword_embed'], ids2_t, axis=0)).astype(BF16)
    emb = emb.reshape(L, N2, EP)
    emb = jnp.pad(emb, ((0, T_all - L), (0, 0), (0, 0)))             # (T_all, N2, 128)

    # conv output-position validity mask (per time step & packed channel block)
    t_idx = jnp.arange(Tp, dtype=jnp.int32)[:, None]
    fs_ch = 2 + jnp.arange(SRP, dtype=jnp.int32)[None, :] // OCP
    tmask = ((t_idx + fs_ch) <= L).astype(F32)[:, None, :]           # (Tp, 1, 384)

    # sentence tile: multiple of 16 (layout-free bf16 reshape), prefer >=2 grid
    # steps so a second TensorCore (v7x) gets work.
    tile_n = 16
    for cand in (256, 128, 64, 32):
        if N2 % cand == 0 and N2 // cand >= 2:
            tile_n = cand
            break

    sent_reps = word_cnn_encoder(emb, params['conv_w'], params['conv_b'],
                                 tmask, tile_n)                      # (N2, 384) bf16
    x0 = sent_reps.reshape(Dlen, BP, SRP)                            # time-major LSTM input

    # sent_masks = batch_masks.bool().any(2).float(), time-major, batch-padded
    sm = jnp.any(batch_masks.astype(bool), axis=2).astype(F32)       # (B, Dlen)
    sm = jnp.pad(jnp.transpose(sm, (1, 0)), ((0, 0), (0, BP - B)))   # (Dlen, BP)
    sent_masks = sm[:, :, None]                                      # (Dlen, BP, 1)

    hid = bilstm_stack(x0, params)                                   # (Dlen, BP, 512) bf16
    logits = attention_and_output(hid, sent_masks, params)           # (BP, 128) f32
    return logits[:B, :label_size]


# =============================================================================
# Deterministic parameter init (shapes follow the PyTorch module __init__),
# stored directly in the padded / packed layouts the kernels expect.
# =============================================================================
def init_params(key, vocab_size, extvocab_size, label_size):
    ks = iter(jax.random.split(key, 32))
    p = {}
    we = 0.1 * jax.random.normal(next(ks), (vocab_size, E), F32)
    we = jnp.pad(we, ((0, 0), (0, EP - E)))
    p['word_embed'] = we.at[0].set(0.0)                  # padding_idx=0
    ee = 0.1 * jax.random.normal(next(ks), (extvocab_size, E), F32)
    ee = jnp.pad(ee, ((0, 0), (0, EP - E)))
    p['extword_embed'] = ee.at[0].set(0.0)               # padding_idx=0, frozen

    # conv weights packed into one (512, 384) lane-aligned matrix; zero-padded
    # in E (100->128), OC (100->128) and in tap rows >= filter_size.
    w_all = jnp.zeros((4 * EP, SRP), F32)
    for ci, fs in enumerate(FILTER_SIZES):
        w = 0.05 * jax.random.normal(next(ks), (fs, E, OC), F32)
        w = jnp.pad(w, ((0, 0), (0, EP - E), (0, OCP - OC))).reshape(fs * EP, OCP)
        w_all = w_all.at[:fs * EP, ci * OCP:(ci + 1) * OCP].set(w)
    p['conv_w'] = w_all.astype(BF16)
    p['conv_b'] = jnp.zeros((1, SRP), F32)

    scale = 1.0 / jnp.sqrt(jnp.float32(H))
    in_sizes = [SRP, 2 * H]
    for layer, insz in enumerate(in_sizes):
        wihs, whhs, bs = [], [], []
        for _ in range(2):                                # fwd, bwd
            wih = scale * jax.random.uniform(next(ks), (insz, 4 * H), F32, -1.0, 1.0)
            if layer == 0:
                # rows fed by the always-zero padded conv channels -> keep exact
                # 300-dim semantics of the original model
                valid = (jnp.arange(insz) % OCP < OC).astype(F32)[:, None]
                wih = wih * valid
            whh = scale * jax.random.uniform(next(ks), (H, 4 * H), F32, -1.0, 1.0)
            b = (scale * jax.random.uniform(next(ks), (1, 4 * H), F32, -1.0, 1.0)
                 + scale * jax.random.uniform(next(ks), (1, 4 * H), F32, -1.0, 1.0))
            wihs.append(wih); whhs.append(whh); bs.append(b)
        p[f'l{layer}_wih'] = jnp.stack(wihs).astype(BF16)   # (2, insz, 4H)
        p[f'l{layer}_whh'] = jnp.stack(whhs).astype(BF16)   # (2, H, 4H)
        p[f'l{layer}_b'] = jnp.stack(bs)                    # (2, 1, 4H)  b_ih + b_hh

    p['attn_w'] = (0.05 * jax.random.normal(next(ks), (H2, H2), F32)).astype(BF16)
    p['attn_b'] = jnp.zeros((1, H2), F32)
    p['attn_q'] = 0.05 * jax.random.normal(next(ks), (1, H2), F32)
    ow = 0.05 * jax.random.normal(next(ks), (H2, label_size), F32)
    p['out_w'] = jnp.pad(ow, ((0, 0), (0, LS_PAD - label_size))).astype(BF16)
    p['out_b'] = jnp.zeros((1, LS_PAD), F32)
    return p


if __name__ == "__main__":
    B, Dlen, L = 2, 4, 8                    # batch, max_doc_len, max_sent_len
    vocab_size, extvocab_size, label_size = 50, 60, 14

    key = jax.random.PRNGKey(0)
    kp, k1, k2, k3 = jax.random.split(key, 4)
    params = init_params(kp, vocab_size, extvocab_size, label_size)

    ids1 = jax.random.randint(k1, (B, Dlen, L), 1, vocab_size)
    ids2 = jax.random.randint(k2, (B, Dlen, L), 1, extvocab_size)
    pad = jax.random.bernoulli(k3, 0.25, (B, Dlen, L))
    ids1 = jnp.where(pad, 0, ids1).astype(jnp.int32)
    ids2 = jnp.where(pad, 0, ids2).astype(jnp.int32)
    masks = (ids1 != 0).astype(F32)

    logits = model_forward(params, ids1, ids2, masks, label_size)
    logits = jax.block_until_ready(logits)
    assert logits.shape == (B, label_size) and logits.dtype == jnp.float32
    print("KERNEL_OK")
</pallas_src>

<mosaic_0001>
module attributes {stable_mosaic.version = 11 : i64} {
  func.func @wordcnn_kernel(%arg0: i32, %arg1: memref<10x32x128xbf16, #tpu.memory_space<vmem>>, %arg2: memref<512x384xbf16, #tpu.memory_space<vmem>>, %arg3: memref<1x384xf32, #tpu.memory_space<vmem>>, %arg4: memref<7x1x384xf32, #tpu.memory_space<vmem>>, %arg5: memref<32x384xbf16, #tpu.memory_space<vmem>>) attributes {dimension_semantics = [#tpu.dimension_semantics<parallel>], iteration_bounds = array<i64: 2>, scalar_prefetch = 0 : i64, scratch_operands = 0 : i64, tpu.core_type = #tpu.core_type<tc>, window_params = [{transform_indices = @transform_0, window_bounds = array<i64: 10, 32, 128>}, {pipeline_mode = #tpu.pipeline_mode<synchronous>, transform_indices = @transform_1, window_bounds = array<i64: 512, 384>}, {pipeline_mode = #tpu.pipeline_mode<synchronous>, transform_indices = @transform_2, window_bounds = array<i64: 1, 384>}, {pipeline_mode = #tpu.pipeline_mode<synchronous>, transform_indices = @transform_3, window_bounds = array<i64: 7, 1, 384>}, {transform_indices = @transform_4, window_bounds = array<i64: 32, 384>}]} {
    %c0 = arith.constant 0 : index
    %c0_0 = arith.constant 0 : index
    %c0_1 = arith.constant 0 : index
    %0 = vector.load %arg1[%c0, %c0_0, %c0_1] : memref<10x32x128xbf16, #tpu.memory_space<vmem>>, vector<10x32x128xbf16>
    %1 = vector.extract_strided_slice %0 {offsets = [0, 0, 0], sizes = [7, 32, 128], strides = [1, 1, 1]} : vector<10x32x128xbf16> to vector<7x32x128xbf16>
    %2 = vector.extract_strided_slice %0 {offsets = [1, 0, 0], sizes = [7, 32, 128], strides = [1, 1, 1]} : vector<10x32x128xbf16> to vector<7x32x128xbf16>
    %3 = vector.extract_strided_slice %0 {offsets = [2, 0, 0], sizes = [7, 32, 128], strides = [1, 1, 1]} : vector<10x32x128xbf16> to vector<7x32x128xbf16>
    %4 = vector.extract_strided_slice %0 {offsets = [3, 0, 0], sizes = [7, 32, 128], strides = [1, 1, 1]} : vector<10x32x128xbf16> to vector<7x32x128xbf16>
    %5 = tpu.concatenate %1, %2, %3, %4 in 2 : vector<7x32x128xbf16>, vector<7x32x128xbf16>, vector<7x32x128xbf16>, vector<7x32x128xbf16> -> vector<7x32x512xbf16>
    %6 = vector.shape_cast %5 : vector<7x32x512xbf16> to vector<224x512xbf16>
    %c0_2 = arith.constant 0 : index
    %c0_3 = arith.constant 0 : index
    %7 = vector.load %arg2[%c0_2, %c0_3] : memref<512x384xbf16, #tpu.memory_space<vmem>>, vector<512x384xbf16>
    %cst = arith.constant dense<0.000000e+00> : vector<224x384xf32>
    %8 = tpu.matmul %6, %7, %cst {dimension_numbers = #tpu.dot_dimension_numbers<[1], [0], [0], [1], [0, 0, 1, 1], [], []>} : vector<224x512xbf16>, vector<512x384xbf16>, vector<224x384xf32> -> vector<224x384xf32>
    %c0_4 = arith.constant 0 : index
    %c0_5 = arith.constant 0 : index
    %9 = vector.load %arg3[%c0_4, %c0_5] : memref<1x384xf32, #tpu.memory_space<vmem>>, vector<1x384xf32>
    %10 = vector.broadcast %9 : vector<1x384xf32> to vector<224x384xf32>
    %11 = arith.addf %8, %10 : vector<224x384xf32>
    %cst_6 = arith.constant 0.000000e+00 : f32
    %12 = vector.broadcast %cst_6 : f32 to vector<224x384xf32>
    %13 = arith.maximumf %11, %12 : vector<224x384xf32>
    %14 = vector.shape_cast %13 : vector<224x384xf32> to vector<7x32x384xf32>
    %c0_7 = arith.constant 0 : index
    %c0_8 = arith.constant 0 : index
    %c0_9 = arith.constant 0 : index
    %15 = vector.load %arg4[%c0_7, %c0_8, %c0_9] : memref<7x1x384xf32, #tpu.memory_space<vmem>>, vector<7x1x384xf32>
    %16 = vector.broadcast %15 : vector<7x1x384xf32> to vector<7x32x384xf32>
    %17 = arith.mulf %14, %16 : vector<7x32x384xf32>
    %cst_10 = arith.constant dense<0xFF800000> : vector<32x384xf32>
    %18 = vector.multi_reduction <maximumf>, %17, %cst_10 [0] : vector<7x32x384xf32> to vector<32x384xf32>
    %19 = arith.truncf %18 : vector<32x384xf32> to vector<32x384xbf16>
    %c0_11 = arith.constant 0 : index
    %c0_12 = arith.constant 0 : index
    %20 = vector.load %arg5[%c0_11, %c0_12] : memref<32x384xbf16, #tpu.memory_space<vmem>>, vector<32x384xbf16>
    tpu.vector_store %arg5[%c0_11, %c0_12], %19 {strides = array<i32>} : memref<32x384xbf16, #tpu.memory_space<vmem>>, vector<32x384xbf16>,
    return
  }
  func.func @transform_0(%arg0: i32) -> (i32, i32, i32) {
    %c0_i32 = arith.constant 0 : i32
    %c0_i32_0 = arith.constant 0 : i32
    %c0_i32_1 = arith.constant 0 : i32
    return %c0_i32, %arg0, %c0_i32_0 : i32, i32, i32
  }
  func.func @transform_1(%arg0: i32) -> (i32, i32) {
    %c0_i32 = arith.constant 0 : i32
    %c0_i32_0 = arith.constant 0 : i32
    %c0_i32_1 = arith.constant 0 : i32
    return %c0_i32, %c0_i32_0 : i32, i32
  }
  func.func @transform_2(%arg0: i32) -> (i32, i32) {
    %c0_i32 = arith.constant 0 : i32
    %c0_i32_0 = arith.constant 0 : i32
    %c0_i32_1 = arith.constant 0 : i32
    return %c0_i32, %c0_i32_0 : i32, i32
  }
  func.func @transform_3(%arg0: i32) -> (i32, i32, i32) {
    %c0_i32 = arith.constant 0 : i32
    %c0_i32_0 = arith.constant 0 : i32
    %c0_i32_1 = arith.constant 0 : i32
    %c0_i32_2 = arith.constant 0 : i32
    return %c0_i32, %c0_i32_0, %c0_i32_1 : i32, i32, i32
  }
  func.func @transform_4(%arg0: i32) -> (i32, i32) {
    %c0_i32 = arith.constant 0 : i32
    %c0_i32_0 = arith.constant 0 : i32
    return %arg0, %c0_i32 : i32, i32
  }
}

</mosaic_0001>

<llo_original>
// kernel: tpu_custom_call.1
$region0: #{tpu_custom_call.1}
  #allocation0 [shape = 'u32[]', space=smem, size = 0x4, offset = 0x4, fixed_abs, tag = 'smem constant byte address 0x4 - core index']
  #allocation1 [shape = 'u32[72,128]{1,0:T(1,128)}', space=vmem, size = 0x9000, scoped, tag = 'internal scratch']
  #allocation11 [shape = 's32[]', space=sflag, size = 0x4, offset = 0, fixed_abs, tag = 'sflag constant byte address 0x0 - dummy sync flag']
  %s0 = inlined_call_operand.hbm [shape: bf16[10,64,128], index: 0, kind: input, shape index: {}]
  %s1 = inlined_call_operand.hbm [shape: bf16[512,384], index: 1, kind: input, shape index: {}]
  %s2 = inlined_call_operand.hbm [shape: f32[1,384], index: 2, kind: input, shape index: {}]
  %s3 = inlined_call_operand.hbm [shape: f32[7,1,384], index: 3, kind: input, shape index: {}]
  %s4 = inlined_call_operand.hbm [shape: bf16[64,384], index: 4, kind: output, shape index: {}]
  %s5 = sld [smem:[#allocation0]]
  $region65: #{tpu_custom_call.1} parent=0
    _
  %s7 = ssub.s32 1, %s5
  %s8 = scalar_select 0, %s7, %s5
  $region1: #{tpu_custom_call.1} parent=0
    #allocation2 [shape = 'u8[163840]{0}', space=vmem, size = 0x28000, scoped, tag = 'input window, operand 0']
    #allocation3 [shape = 's32[2]{0}', space=sflag, size = 0x8, scoped, tag = 'scoped memory for tpu_custom_call.1']
    #allocation4 [shape = 's32[2]{0}', space=sflag, size = 0x8, scoped, tag = 'scoped memory for tpu_custom_call.1']
    #allocation5 [shape = 'u8[393216]{0}', space=vmem, size = 0x60000, scoped, tag = 'input window, operand 1, single buffered']
    #allocation6 [shape = 's32[1]{0}', space=sflag, size = 0x4, scoped, tag = 'scoped memory for tpu_custom_call.1']
    #allocation7 [shape = 'u8[1536]{0}', space=vmem, size = 0x800, scoped, tag = 'input window, operand 2, single buffered']
    #allocation8 [shape = 'u8[10752]{0}', space=vmem, size = 0x2c00, scoped, tag = 'input window, operand 3, single buffered']
    #allocation9 [shape = 's32[1]{0}', space=sflag, size = 0x4, scoped, tag = 'scoped memory for tpu_custom_call.1']
    #allocation10 [shape = 'u8[49152]{0}', space=vmem, size = 0xc000, scoped, tag = 'output window, operand 0']
    %9 = vsyncpa [#allocation3], 0
    %s10 = scalar_lea.sflag [#allocation3], 1
    %11 = vsyncpa %s10, 0
    %12 = vsyncpa [#allocation6], 0
    %13 = vsyncpa [#allocation9], 0
    %14 = vsyncpa [#allocation4], 0
    %s15 = scalar_lea.sflag [#allocation4], 1
    %16 = vsyncpa %s15, 0
    loop: start=0, step=1, limit=4
    $region2: #{tpu_custom_call.1} parent=1 // loop_pre_header
      _
    $region3: #{tpu_custom_call.1} parent=1 // loop_header
      %s18 = sphi 0, %s22
      %p19 = scmp.ge.s32.totalorder %s18, 4
      %s28 = sphi 0, %s30
      %s31 = sphi 0, %s28
      %s32 = sphi 0, %s31
      %s48 = sphi 0, %s32
      %s52 = sphi 0, %s52
      %s54 = sphi 0, %s52
      %s55 = sphi 0, %s54
      %s69 = sphi 0, %s55
      %s73 = sphi 0, %s73
      %s75 = sphi 0, %s73
      %s76 = sphi 0, %s75
      %s90 = sphi 0, %s76
      %s94 = sphi 0, %s94
      %s96 = sphi 0, %s94
      %s97 = sphi 0, %s96
      %s111 = sphi 0, %s97
      %s117 = sphi 0, %s119
      %s120 = sphi 0, %s117
      %s121 = sphi 0, %s120
      %s137 = sphi 0, %s121
    $region4: #{tpu_custom_call.1} parent=1 // loop_header_branch
      %21 = sbr.rel (%p19) target = $region8
    $region5: #{tpu_custom_call.1} parent=1 // loop_body
      %s23 = ssub.s32 %s18, 1
      %s24 = ssub.s32 %s18, 2
      %s25 = sadd.s32 %s18, 1
      %s26 = ssub.s32 %s18, %s25
      %p27 = scmp.eq.s32.totalorder %s26, 0
      %s29 = sadd.s32 %s28, 1
      %s30 = scalar_select %p27, %s28, %s29
      %p33 = pneg %p27
      %p34 = scmp.eq.s32.totalorder %s18, 1
      %p35 = por %p33, %p34
      %p36 = scmp.ne.s32.totalorder %s28, %s31
      %p37 = scmp.eq.s32.totalorder %s18, 0
      %p38 = por %p36, %p37
      %p39 = scmp.ne.s32.totalorder %s28, %s31
      %p40 = scmp.eq.s32.totalorder %s23, 1
      %p41 = por %p39, %p40
      %p42 = scmp.ne.s32.totalorder %s31, %s32
      %p43 = scmp.eq.s32.totalorder %s23, 0
      %p44 = por %p42, %p43
      %p45 = scmp.ne.s32.totalorder %s31, %s32
      %p46 = scmp.eq.s32.totalorder %s24, 1
      %p47 = por %p45, %p46
      %p49 = scmp.ne.s32.totalorder %s32, %s48
      %p50 = scmp.eq.s32.totalorder %s24, 0
      %p51 = por %p49, %p50
      %s53 = sadd.s32 %s52, 1
      %p56 = scmp.eq.s32.totalorder %s18, 1
      %p57 = scmp.ne.s32.totalorder %s52, %s54
      %p58 = scmp.eq.s32.totalorder %s18, 0
      %p59 = por %p57, %p58
      %p60 = scmp.ne.s32.totalorder %s52, %s54
      %p61 = scmp.eq.s32.totalorder %s23, 1
      %p62 = por %p60, %p61
      %p63 = scmp.ne.s32.totalorder %s54, %s55
      %p64 = scmp.eq.s32.totalorder %s23, 0
      %p65 = por %p63, %p64
      %p66 = scmp.ne.s32.totalorder %s54, %s55
      %p67 = scmp.eq.s32.totalorder %s24, 1
      %p68 = por %p66, %p67
      %p70 = scmp.ne.s32.totalorder %s55, %s69
      %p71 = scmp.eq.s32.totalorder %s24, 0
      %p72 = por %p70, %p71
      %s74 = sadd.s32 %s73, 1
      %p77 = scmp.eq.s32.totalorder %s18, 1
      %p78 = scmp.ne.s32.totalorder %s73, %s75
      %p79 = scmp.eq.s32.totalorder %s18, 0
      %p80 = por %p78, %p79
      %p81 = scmp.ne.s32.totalorder %s73, %s75
      %p82 = scmp.eq.s32.totalorder %s23, 1
      %p83 = por %p81, %p82
      %p84 = scmp.ne.s32.totalorder %s75, %s76
      %p85 = scmp.eq.s32.totalorder %s23, 0
      %p86 = por %p84, %p85
      %p87 = scmp.ne.s32.totalorder %s75, %s76
      %p88 = scmp.eq.s32.totalorder %s24, 1
      %p89 = por %p87, %p88
      %p91 = scmp.ne.s32.totalorder %s76, %s90
      %p92 = scmp.eq.s32.totalorder %s24, 0
      %p93 = por %p91, %p92
      %s95 = sadd.s32 %s94, 1
      %p98 = scmp.eq.s32.totalorder %s18, 1
      %p99 = scmp.ne.s32.totalorder %s94, %s96
      %p100 = scmp.eq.s32.totalorder %s18, 0
      %p101 = por %p99, %p100
      %p102 = scmp.ne.s32.totalorder %s94, %s96
      %p103 = scmp.eq.s32.totalorder %s23, 1
      %p104 = por %p102, %p103
      %p105 = scmp.ne.s32.totalorder %s96, %s97
      %p106 = scmp.eq.s32.totalorder %s23, 0
      %p107 = por %p105, %p106
      %p108 = scmp.ne.s32.totalorder %s96, %s97
      %p109 = scmp.eq.s32.totalorder %s24, 1
      %p110 = por %p108, %p109
      %p112 = scmp.ne.s32.totalorder %s97, %s111
      %p113 = scmp.eq.s32.totalorder %s24, 0
      %p114 = por %p112, %p113
      %s115 = ssub.s32 %s18, %s25
      %p116 = scmp.eq.s32.totalorder %s115, 0
      %s118 = sadd.s32 %s117, 1
      %s119 = scalar_select %p116, %s117, %s118
      %p122 = pneg %p116
      %p123 = scmp.eq.s32.totalorder %s18, 1
      %p124 = por %p122, %p123
      %p125 = scmp.ne.s32.totalorder %s117, %s120
      %p126 = scmp.eq.s32.totalorder %s18, 0
      %p127 = por %p125, %p126
      %p128 = scmp.ne.s32.totalorder %s117, %s120
      %p129 = scmp.eq.s32.totalorder %s23, 1
      %p130 = por %p128, %p129
      %p131 = scmp.ne.s32.totalorder %s120, %s121
      %p132 = scmp.eq.s32.totalorder %s23, 0
      %p133 = por %p131, %p132
      %p134 = scmp.ne.s32.totalorder %s120, %s121
      %p135 = scmp.eq.s32.totalorder %s24, 1
      %p136 = por %p134, %p135
      %p138 = scmp.ne.s32.totalorder %s121, %s137
      %p139 = scmp.eq.s32.totalorder %s24, 0
      %p140 = por %p138, %p139
      %p141 = scmp.le.s32.totalorder 1, %s18
      %p142 = scmp.lt.s32.totalorder %s18, 3
      %p143 = pnand %p141, %p142
      %p144 = pneg %p143
      // Predicated region
      $region9: #{tpu_custom_call.1} parent=5 // pred_check
        _
      $region10: #{tpu_custom_call.1} parent=5 // pred_check_branch
        %146 = sbr.rel (%p143) target = $region12
      $region11: #{tpu_custom_call.1} parent=5 // pred_region
        %s147 = ssub.s32 %s18, 1
        // Predicated region
        $region13: #{tpu_custom_call.1} parent=11 // pred_check
          %p148 = pneg %p65
        $region14: #{tpu_custom_call.1} parent=11 // pred_check_branch
          %150 = sbr.rel (%p148) target = $region16
        $region15: #{tpu_custom_call.1} parent=11 // pred_region
          %152 = vsyncadd [#allocation6], 0
          %s153 = sshll.u32 %s1, 4
          %s154 = int_to_ptr.hbm [resolvable:$true] %s153
          %s155 = sshll.u32 [#allocation5], 4
          %s156 = int_to_ptr.vmem [resolvable:$true] %s155
          %161 = dma.hbm_to_vmem [thread:$0]  %s154, 12288, %s156, [#allocation6], 192, 192, 12
        $region16: #{tpu_custom_call.1} parent=11 // pred_fallthru
          _
        // Predicated region
        $region17: #{tpu_custom_call.1} parent=11 // pred_check
          %p162 = pneg %p86
        $region18: #{tpu_custom_call.1} parent=11 // pred_check_branch
          %164 = sbr.rel (%p162) target = $region20
        $region19: #{tpu_custom_call.1} parent=11 // pred_region
          %166 = vsyncadd [#allocation6], 0
          %s168 = sshll.u32 %s2, 4
          %s169 = int_to_ptr.hbm [resolvable:$true] %s168
          %s170 = sshll.u32 [#allocation7], 4
          %s171 = int_to_ptr.vmem [resolvable:$true] %s170
          %173 = dma.hbm_to_vmem [thread:$0]  %s169, 48, %s171, [#allocation6]
        $region20: #{tpu_custom_call.1} parent=11 // pred_fallthru
          _
        // Predicated region
        $region21: #{tpu_custom_call.1} parent=11 // pred_check
          %p174 = pneg %p107
        $region22: #{tpu_custom_call.1} parent=11 // pred_check_branch
          %176 = sbr.rel (%p174) target = $region24
        $region23: #{tpu_custom_call.1} parent=11 // pred_region
          %178 = vsyncadd [#allocation9], 0
          %s179 = sshll.u32 %s3, 4
          %s180 = int_to_ptr.hbm [resolvable:$true] %s179
          %s181 = sshll.u32 [#allocation8], 4
          %s182 = int_to_ptr.vmem [resolvable:$true] %s181
          %187 = dma.hbm_to_vmem [thread:$0]  %s180, 336, %s182, [#allocation9], 48, 48, 3
        $region24: #{tpu_custom_call.1} parent=11 // pred_fallthru
          _
      $region12: #{tpu_custom_call.1} parent=5 // pred_fallthru
        _
      %p188 = scmp.lt.s32.totalorder %s18, 2
      // Predicated region
      $region25: #{tpu_custom_call.1} parent=5 // pred_check
        %p189 = pneg %p188
      $region26: #{tpu_custom_call.1} parent=5 // pred_check_branch
        %191 = sbr.rel (%p189) target = $region28
      $region27: #{tpu_custom_call.1} parent=5 // pred_region
        // Predicated region
        $region29: #{tpu_custom_call.1} parent=27 // pred_check
          %p192 = pneg %p38
        $region30: #{tpu_custom_call.1} parent=27 // pred_check_branch
          %194 = sbr.rel (%p192) target = $region32
        $region31: #{tpu_custom_call.1} parent=27 // pred_region
          #allocation12 [shape = 'u32[6]{0}', space=smem, size = 0x18, scoped, tag = 'DMA stride descriptor']
          %s195 = sand.u32 %s28, 1
          %s196 = scalar_lea.sflag [#allocation3], %s195
          %s197 = sand.u32 %s28, 1
          %s198 = smul.addr %s197, 160
          %s199 = scalar_lea.vmem [#allocation2], %s198
          %s200 = smul.u32 4, %s18
          %202 = vsyncadd %s196, 0
          %s203 = smul.addr %s200, 4
          %s204 = scalar_lea.hbm %s0, %s203
          %s206 = sshll.u32 1, 14
          %s207 = sxor.u32 4294967295, %s206
          %s209 = sld [smem:[#allocation0]]
          %s210 = sadd.s32 2, %s209
          %s212 = sshll.u32 7, 26
          %s213 = sxor.u32 4294967295, %s212
          %s214 = sand.u32 0, %s213
          %s215 = sshll.u32 %s210, 26
          %s216 = sor.u32 %s214, %s215
          %s217 = sshll.u32 %s204, 4
          %s218 = int_to_ptr.hbm [resolvable:$true] %s217
          %s219 = sshll.u32 %s199, 4
          %s220 = int_to_ptr.vmem [resolvable:$true] %s219
          %226 = sst [smem:[#allocation12]] 512
          %s227 = scalar_lea.smem [#allocation12], 1
          %228 = sst [smem:[%s227]] 256
          %s229 = scalar_lea.smem [#allocation12], 2
          %230 = sst [smem:[%s229]] 4
          %s231 = scalar_lea.smem [#allocation12], 3
          %232 = sst [smem:[%s231]] 64
          %s233 = scalar_lea.smem [#allocation12], 4
          %234 = sst [smem:[%s233]] 64
          %s235 = scalar_lea.smem [#allocation12], 5
          %236 = sst [smem:[%s235]] 4
          %238 = dma.general %s218, 2560, %s220, %s196, [#allocation11], [#allocation12], %s216, 0
        $region32: #{tpu_custom_call.1} parent=27 // pred_fallthru
          _
      $region28: #{tpu_custom_call.1} parent=5 // pred_fallthru
        _
      %p239 = scmp.le.s32.totalorder 1, %s18
      %p240 = scmp.lt.s32.totalorder %s18, 3
      %p241 = pnand %p239, %p240
      %p242 = pneg %p241
      // Predicated region
      $region33: #{tpu_custom_call.1} parent=5 // pred_check
        _
      $region34: #{tpu_custom_call.1} parent=5 // pred_check_branch
        %244 = sbr.rel (%p241) target = $region36
      $region35: #{tpu_custom_call.1} parent=5 // pred_region
        %s245 = ssub.s32 %s18, 1
        %s246 = sand.u32 %s31, 1
        %s247 = scalar_lea.sflag [#allocation3], %s246
        %s248 = sand.u32 %s31, 1
        %s249 = smul.addr %s248, 160
        %s250 = scalar_lea.vmem [#allocation2], %s249
        // Predicated region
        $region37: #{tpu_custom_call.1} parent=35 // pred_check
          %p251 = pneg %p44
        $region38: #{tpu_custom_call.1} parent=35 // pred_check_branch
          %253 = sbr.rel (%p251) target = $region40
        $region39: #{tpu_custom_call.1} parent=35 // pred_region
          %255 = dma.done %s247, 2560
        $region40: #{tpu_custom_call.1} parent=35 // pred_fallthru
          _
        // Predicated region
        $region41: #{tpu_custom_call.1} parent=35 // pred_check
          %p256 = pneg %p65
        $region42: #{tpu_custom_call.1} parent=35 // pred_check_branch
          %258 = sbr.rel (%p256) target = $region44
        $region43: #{tpu_custom_call.1} parent=35 // pred_region
          %260 = dma.done [#allocation6], 12288
        $region44: #{tpu_custom_call.1} parent=35 // pred_fallthru
          _
        // Predicated region
        $region45: #{tpu_custom_call.1} parent=35 // pred_check
          %p261 = pneg %p86
        $region46: #{tpu_custom_call.1} parent=35 // pred_check_branch
          %263 = sbr.rel (%p261) target = $region48
        $region47: #{tpu_custom_call.1} parent=35 // pred_region
          %265 = dma.done [#allocation6], 48
        $region48: #{tpu_custom_call.1} parent=35 // pred_fallthru
          _
        // Predicated region
        $region49: #{tpu_custom_call.1} parent=35 // pred_check
          %p266 = pneg %p107
        $region50: #{tpu_custom_call.1} parent=35 // pred_check_branch
          %268 = sbr.rel (%p266) target = $region52
        $region51: #{tpu_custom_call.1} parent=35 // pred_region
          %270 = dma.done [#allocation9], 336
        $region52: #{tpu_custom_call.1} parent=35 // pred_fallthru
          _
        %s271 = sand.u32 %s31, 1
        %s272 = scalar_lea.sflag [#allocation3], %s271
        %s273 = sand.u32 %s31, 1
        %s274 = smul.addr %s273, 160
        %s275 = scalar_lea.vmem [#allocation2], %s274
        %p276 = pneg %p44
        %p277 = pneg %p41
        %p278 = pneg %p65
        %p279 = pneg %p62
        %p280 = pneg %p86
        %p281 = pneg %p83
        %p282 = pneg %p107
        %p283 = pneg %p104
        %p284 = pneg %p133
        %p285 = pneg %p130
        %s286 = sand.u32 %s120, 1
        %s287 = scalar_lea.sflag [#allocation4], %s286
        %s288 = sand.u32 %s120, 1
        %s289 = smul.addr %s288, 48
        %s290 = scalar_lea.vmem [#allocation10], %s289
        %s291 = smul.u32 4, %s23
        %s292 = smul.u32 4, %s23
        %v293 = vld [vmem:[%s250] sm:$0xf]
        %v294 = vld [vmem:[%s250 + $0x4] sm:$0xf]
        %v295 = vld [vmem:[%s250 + $0x8] sm:$0xf]
        %v296 = vld [vmem:[%s250 + $0xc] sm:$0xf]
        %v297 = vld [vmem:[%s250 + $0x10] sm:$0xf]
        %v298 = vld [vmem:[%s250 + $0x14] sm:$0xf]
        %v299 = vld [vmem:[%s250 + $0x18] sm:$0xf]
        %v300 = vld [vmem:[%s250 + $0x1c] sm:$0xf]
        %v301 = vld [vmem:[%s250 + $0x20] sm:$0xf]
        %v302 = vld [vmem:[%s250 + $0x24] sm:$0xf]
        %v303 = vld [vmem:[%s250 + $0x28] sm:$0xf]
        %v304 = vld [vmem:[%s250 + $0x2c] sm:$0xf]
        %v305 = vld [vmem:[%s250 + $0x30] sm:$0xf]
        %v306 = vld [vmem:[%s250 + $0x34] sm:$0xf]
        %v307 = vld [vmem:[%s250 + $0x38] sm:$0xf]
        %v308 = vld [vmem:[%s250 + $0x3c] sm:$0xf]
        %v309 = vld [vmem:[%s250 + $0x40] sm:$0xf]
        %v310 = vld [vmem:[%s250 + $0x44] sm:$0xf]
        %v311 = vld [vmem:[%s250 + $0x48] sm:$0xf]
        %v312 = vld [vmem:[%s250 + $0x4c] sm:$0xf]
        %v313 = vld [vmem:[%s250 + $0x50] sm:$0xf]
        %v314 = vld [vmem:[%s250 + $0x54] sm:$0xf]
        %v315 = vld [vmem:[%s250 + $0x58] sm:$0xf]
        %v316 = vld [vmem:[%s250 + $0x5c] sm:$0xf]
        %v317 = vld [vmem:[%s250 + $0x60] sm:$0xf]
        %v318 = vld [vmem:[%s250 + $0x64] sm:$0xf]
        %v319 = vld [vmem:[%s250 + $0x68] sm:$0xf]
        %v320 = vld [vmem:[%s250 + $0x6c] sm:$0xf]
        %v321 = vld [vmem:[%s250 + $0x70] sm:$0xf]
        %v322 = vld [vmem:[%s250 + $0x74] sm:$0xf]
        %v323 = vld [vmem:[%s250 + $0x78] sm:$0xf]
        %v324 = vld [vmem:[%s250 + $0x7c] sm:$0xf]
        %v325 = vld [vmem:[%s250 + $0x80] sm:$0xf]
        %v326 = vld [vmem:[%s250 + $0x84] sm:$0xf]
        %v327 = vld [vmem:[%s250 + $0x88] sm:$0xf]
        %v328 = vld [vmem:[%s250 + $0x8c] sm:$0xf]
        %v329 = vld [vmem:[%s250 + $0x90] sm:$0xf]
        %v330 = vld [vmem:[%s250 + $0x94] sm:$0xf]
        %v331 = vld [vmem:[%s250 + $0x98] sm:$0xf]
        %v332 = vld [vmem:[%s250 + $0x9c] sm:$0xf]
        %v361 = vunpack.c.l.b16 %v293
        %v362 = vunpack.c.l.b16 %v294
        %v363 = vunpack.c.l.b16 %v295
        %v364 = vunpack.c.l.b16 %v296
        %v365 = vunpack.c.l.b16 %v297
        %v366 = vunpack.c.l.b16 %v298
        %v367 = vunpack.c.l.b16 %v299
        %v368 = vunpack.c.l.b16 %v300
        %v369 = vunpack.c.l.b16 %v301
        %v370 = vunpack.c.l.b16 %v302
        %v371 = vunpack.c.l.b16 %v303
        %v372 = vunpack.c.l.b16 %v304
        %v373 = vunpack.c.l.b16 %v305
        %v374 = vunpack.c.l.b16 %v306
        %v375 = vunpack.c.l.b16 %v307
        %v376 = vunpack.c.l.b16 %v308
        %v377 = vunpack.c.l.b16 %v309
        %v378 = vunpack.c.l.b16 %v310
        %v379 = vunpack.c.l.b16 %v311
        %v380 = vunpack.c.l.b16 %v312
        %v381 = vunpack.c.l.b16 %v313
        %v382 = vunpack.c.l.b16 %v314
        %v383 = vunpack.c.l.b16 %v315
        %v384 = vunpack.c.l.b16 %v316
        %v385 = vunpack.c.l.b16 %v317
        %v386 = vunpack.c.l.b16 %v318
        %v387 = vunpack.c.l.b16 %v319
        %v388 = vunpack.c.l.b16 %v320
        %v389 = vpack.c.b16 %v362, %v361
        %v390 = vpack.c.b16 %v364, %v363
        %v391 = vpack.c.b16 %v366, %v365
        %v392 = vpack.c.b16 %v368, %v367
        %v393 = vpack.c.b16 %v370, %v369
        %v394 = vpack.c.b16 %v372, %v371
        %v395 = vpack.c.b16 %v374, %v373
        %v396 = vpack.c.b16 %v376, %v375
        %v397 = vpack.c.b16 %v378, %v377
        %v398 = vpack.c.b16 %v380, %v379
        %v399 = vpack.c.b16 %v382, %v381
        %v400 = vpack.c.b16 %v384, %v383
        %v401 = vpack.c.b16 %v386, %v385
        %v402 = vpack.c.b16 %v388, %v387
        %v421 = vunpack.c.l.b16 %v321
        %v422 = vunpack.c.l.b16 %v322
        %v423 = vunpack.c.l.b16 %v323
        %v424 = vunpack.c.l.b16 %v324
        %v425 = vpack.c.b16 %v422, %v421
        %v426 = vpack.c.b16 %v424, %v423
        %v433 = vunpack.c.l.b16 %v325
        %v434 = vunpack.c.l.b16 %v326
        %v435 = vunpack.c.l.b16 %v327
        %v436 = vunpack.c.l.b16 %v328
        %v437 = vpack.c.b16 %v434, %v433
        %v438 = vpack.c.b16 %v436, %v435
        %v445 = vunpack.c.l.b16 %v329
        %v446 = vunpack.c.l.b16 %v330
        %v447 = vunpack.c.l.b16 %v331
        %v448 = vunpack.c.l.b16 %v332
        %v449 = vpack.c.b16 %v446, %v445
        %v450 = vpack.c.b16 %v448, %v447
        %v453 = vld [vmem:[#allocation5] sm:$0xff]
        %v454 = vld [vmem:[#allocation5 + $0x8] sm:$0xf]
        %v455 = vld [vmem:[#allocation5 + $0xc] sm:$0xff]
        %v456 = vld [vmem:[#allocation5 + $0x14] sm:$0xf]
        %v457 = vld [vmem:[#allocation5 + $0x18] sm:$0xff]
        %v458 = vld [vmem:[#allocation5 + $0x20] sm:$0xf]
        %v459 = vld [vmem:[#allocation5 + $0x24] sm:$0xff]
        %v460 = vld [vmem:[#allocation5 + $0x2c] sm:$0xf]
        %v461 = vld [vmem:[#allocation5 + $0x30] sm:$0xff]
        %v462 = vld [vmem:[#allocation5 + $0x38] sm:$0xf]
        %v463 = vld [vmem:[#allocation5 + $0x3c] sm:$0xff]
        %v464 = vld [vmem:[#allocation5 + $0x44] sm:$0xf]
        %v465 = vld [vmem:[#allocation5 + $0x48] sm:$0xff]
        %v466 = vld [vmem:[#allocation5 + $0x50] sm:$0xf]
        %v467 = vld [vmem:[#allocation5 + $0x54] sm:$0xff]
        %v468 = vld [vmem:[#allocation5 + $0x5c] sm:$0xf]
        %v469 = vld [vmem:[#allocation5 + $0x60] sm:$0xff]
        %v470 = vld [vmem:[#allocation5 + $0x68] sm:$0xf]
        %v471 = vld [vmem:[#allocation5 + $0x6c] sm:$0xff]
        %v472 = vld [vmem:[#allocation5 + $0x74] sm:$0xf]
        %v473 = vld [vmem:[#allocation5 + $0x78] sm:$0xff]
        %v474 = vld [vmem:[#allocation5 + $0x80] sm:$0xf]
        %v475 = vld [vmem:[#allocation5 + $0x84] sm:$0xff]
        %v476 = vld [vmem:[#allocation5 + $0x8c] sm:$0xf]
        %v477 = vld [vmem:[#allocation5 + $0x90] sm:$0xff]
        %v478 = vld [vmem:[#allocation5 + $0x98] sm:$0xf]
        %v479 = vld [vmem:[#allocation5 + $0x9c] sm:$0xff]
        %v480 = vld [vmem:[#allocation5 + $0xa4] sm:$0xf]
        %v481 = vld [vmem:[#allocation5 + $0xa8] sm:$0xff]
        %v482 = vld [vmem:[#allocation5 + $0xb0] sm:$0xf]
        %v483 = vld [vmem:[#allocation5 + $0xb4] sm:$0xff]
        %v484 = vld [vmem:[#allocation5 + $0xbc] sm:$0xf]
        %v485 = vld [vmem:[#allocation5 + $0xc0] sm:$0xff]
        %v486 = vld [vmem:[#allocation5 + $0xc8] sm:$0xf]
        %v487 = vld [vmem:[#allocation5 + $0xcc] sm:$0xff]
        %v488 = vld [vmem:[#allocation5 + $0xd4] sm:$0xf]
        %v489 = vld [vmem:[#allocation5 + $0xd8] sm:$0xff]
        %v490 = vld [vmem:[#allocation5 + $0xe0] sm:$0xf]
        %v491 = vld [vmem:[#allocation5 + $0xe4] sm:$0xff]
        %v492 = vld [vmem:[#allocation5 + $0xec] sm:$0xf]
        %v493 = vld [vmem:[#allocation5 + $0xf0] sm:$0xff]
        %v494 = vld [vmem:[#allocation5 + $0xf8] sm:$0xf]
        %v495 = vld [vmem:[#allocation5 + $0xfc] sm:$0xff]
        %v496 = vld [vmem:[#allocation5 + $0x104] sm:$0xf]
        %v497 = vld [vmem:[#allocation5 + $0x108] sm:$0xff]
        %v498 = vld [vmem:[#allocation5 + $0x110] sm:$0xf]
        %v499 = vld [vmem:[#allocation5 + $0x114] sm:$0xff]
        %v500 = vld [vmem:[#allocation5 + $0x11c] sm:$0xf]
        %v501 = vld [vmem:[#allocation5 + $0x120] sm:$0xff]
        %v502 = vld [vmem:[#allocation5 + $0x128] sm:$0xf]
        %v503 = vld [vmem:[#allocation5 + $0x12c] sm:$0xff]
        %v504 = vld [vmem:[#allocation5 + $0x134] sm:$0xf]
        %v505 = vld [vmem:[#allocation5 + $0x138] sm:$0xff]
        %v506 = vld [vmem:[#allocation5 + $0x140] sm:$0xf]
        %v507 = vld [vmem:[#allocation5 + $0x144] sm:$0xff]
        %v508 = vld [vmem:[#allocation5 + $0x14c] sm:$0xf]
        %v509 = vld [vmem:[#allocation5 + $0x150] sm:$0xff]
        %v510 = vld [vmem:[#allocation5 + $0x158] sm:$0xf]
        %v511 = vld [vmem:[#allocation5 + $0x15c] sm:$0xff]
        %v512 = vld [vmem:[#allocation5 + $0x164] sm:$0xf]
        %v513 = vld [vmem:[#allocation5 + $0x168] sm:$0xff]
        %v514 = vld [vmem:[#allocation5 + $0x170] sm:$0xf]
        %v515 = vld [vmem:[#allocation5 + $0x174] sm:$0xff]
        %v516 = vld [vmem:[#allocation5 + $0x17c] sm:$0xf]
        %v517 = vld [vmem:[#allocation5 + $0x180] sm:$0xff]
        %v518 = vld [vmem:[#allocation5 + $0x188] sm:$0xf]
        %v519 = vld [vmem:[#allocation5 + $0x18c] sm:$0xff]
        %v520 = vld [vmem:[#allocation5 + $0x194] sm:$0xf]
        %v521 = vld [vmem:[#allocation5 + $0x198] sm:$0xff]
        %v522 = vld [vmem:[#allocation5 + $0x1a0] sm:$0xf]
        %v523 = vld [vmem:[#allocation5 + $0x1a4] sm:$0xff]
        %v524 = vld [vmem:[#allocation5 + $0x1ac] sm:$0xf]
        %v525 = vld [vmem:[#allocation5 + $0x1b0] sm:$0xff]
        %v526 = vld [vmem:[#allocation5 + $0x1b8] sm:$0xf]
        %v527 = vld [vmem:[#allocation5 + $0x1bc] sm:$0xff]
        %v528 = vld [vmem:[#allocation5 + $0x1c4] sm:$0xf]
        %v529 = vld [vmem:[#allocation5 + $0x1c8] sm:$0xff]
        %v530 = vld [vmem:[#allocation5 + $0x1d0] sm:$0xf]
        %v531 = vld [vmem:[#allocation5 + $0x1d4] sm:$0xff]
        %v532 = vld [vmem:[#allocation5 + $0x1dc] sm:$0xf]
        %v533 = vld [vmem:[#allocation5 + $0x1e0] sm:$0xff]
        %v534 = vld [vmem:[#allocation5 + $0x1e8] sm:$0xf]
        %v535 = vld [vmem:[#allocation5 + $0x1ec] sm:$0xff]
        %v536 = vld [vmem:[#allocation5 + $0x1f4] sm:$0xf]
        %v537 = vld [vmem:[#allocation5 + $0x1f8] sm:$0xff]
        %v538 = vld [vmem:[#allocation5 + $0x200] sm:$0xf]
        %v539 = vld [vmem:[#allocation5 + $0x204] sm:$0xff]
        %v540 = vld [vmem:[#allocation5 + $0x20c] sm:$0xf]
        %v541 = vld [vmem:[#allocation5 + $0x210] sm:$0xff]
        %v542 = vld [vmem:[#allocation5 + $0x218] sm:$0xf]
        %v543 = vld [vmem:[#allocation5 + $0x21c] sm:$0xff]
        %v544 = vld [vmem:[#allocation5 + $0x224] sm:$0xf]
        %v545 = vld [vmem:[#allocation5 + $0x228] sm:$0xff]
        %v546 = vld [vmem:[#allocation5 + $0x230] sm:$0xf]
        %v547 = vld [vmem:[#allocation5 + $0x234] sm:$0xff]
        %v548 = vld [vmem:[#allocation5 + $0x23c] sm:$0xf]
        %v549 = vld [vmem:[#allocation5 + $0x240] sm:$0xff]
        %v550 = vld [vmem:[#allocation5 + $0x248] sm:$0xf]
        %v551 = vld [vmem:[#allocation5 + $0x24c] sm:$0xff]
        %v552 = vld [vmem:[#allocation5 + $0x254] sm:$0xf]
        %v553 = vld [vmem:[#allocation5 + $0x258] sm:$0xff]
        %v554 = vld [vmem:[#allocation5 + $0x260] sm:$0xf]
        %v555 = vld [vmem:[#allocation5 + $0x264] sm:$0xff]
        %v556 = vld [vmem:[#allocation5 + $0x26c] sm:$0xf]
        %v557 = vld [vmem:[#allocation5 + $0x270] sm:$0xff]
        %v558 = vld [vmem:[#allocation5 + $0x278] sm:$0xf]
        %v559 = vld [vmem:[#allocation5 + $0x27c] sm:$0xff]
        %v560 = vld [vmem:[#allocation5 + $0x284] sm:$0xf]
        %v561 = vld [vmem:[#allocation5 + $0x288] sm:$0xff]
        %v562 = vld [vmem:[#allocation5 + $0x290] sm:$0xf]
        %v563 = vld [vmem:[#allocation5 + $0x294] sm:$0xff]
        %v564 = vld [vmem:[#allocation5 + $0x29c] sm:$0xf]
        %v565 = vld [vmem:[#allocation5 + $0x2a0] sm:$0xff]
        %v566 = vld [vmem:[#allocation5 + $0x2a8] sm:$0xf]
        %v567 = vld [vmem:[#allocation5 + $0x2ac] sm:$0xff]
        %v568 = vld [vmem:[#allocation5 + $0x2b4] sm:$0xf]
        %v569 = vld [vmem:[#allocation5 + $0x2b8] sm:$0xff]
        %v570 = vld [vmem:[#allocation5 + $0x2c0] sm:$0xf]
        %v571 = vld [vmem:[#allocation5 + $0x2c4] sm:$0xff]
        %v572 = vld [vmem:[#allocation5 + $0x2cc] sm:$0xf]
        %v573 = vld [vmem:[#allocation5 + $0x2d0] sm:$0xff]
        %v574 = vld [vmem:[#allocation5 + $0x2d8] sm:$0xf]
        %v575 = vld [vmem:[#allocation5 + $0x2dc] sm:$0xff]
        %v576 = vld [vmem:[#allocation5 + $0x2e4] sm:$0xf]
        %v577 = vld [vmem:[#allocation5 + $0x2e8] sm:$0xff]
        %v578 = vld [vmem:[#allocation5 + $0x2f0] sm:$0xf]
        %v579 = vld [vmem:[#allocation5 + $0x2f4] sm:$0xff]
        %v580 = vld [vmem:[#allocation5 + $0x2fc] sm:$0xf]
        %v581 = vld [vmem:[#allocation7] sm:$0x7]
        %v583 = vperm.slane %v581, 0
        %v584 = vperm.slane %v581, 1
        %v585 = vperm.slane %v581, 2
        %v717 = vunpack.c.l.b16 %v453
        %v718 = vunpack.c.h.b16 %v453
        %v719 = vunpack.c.l.b16 %v454
        %v720 = vunpack.c.l.b16 %v455
        %v721 = vunpack.c.h.b16 %v455
        %v722 = vunpack.c.l.b16 %v456
        %v723 = vunpack.c.l.b16 %v457
        %v724 = vunpack.c.h.b16 %v457
        %v725 = vunpack.c.l.b16 %v458
        %v726 = vunpack.c.l.b16 %v459
        %v727 = vunpack.c.h.b16 %v459
        %v728 = vunpack.c.l.b16 %v460
        %v729 = vunpack.c.l.b16 %v461
        %v730 = vunpack.c.h.b16 %v461
        %v731 = vunpack.c.l.b16 %v462
        %v732 = vunpack.c.l.b16 %v463
        %v733 = vunpack.c.h.b16 %v463
        %v734 = vunpack.c.l.b16 %v464
        %v735 = vunpack.c.l.b16 %v465
        %v736 = vunpack.c.h.b16 %v465
        %v737 = vunpack.c.l.b16 %v466
        %v738 = vunpack.c.l.b16 %v467
        %v739 = vunpack.c.h.b16 %v467
        %v740 = vunpack.c.l.b16 %v468
        %v741 = vunpack.c.l.b16 %v469
        %v742 = vunpack.c.h.b16 %v469
        %v743 = vunpack.c.l.b16 %v470
        %v744 = vunpack.c.l.b16 %v471
        %v745 = vunpack.c.h.b16 %v471
        %v746 = vunpack.c.l.b16 %v472
        %v747 = vunpack.c.l.b16 %v473
        %v748 = vunpack.c.h.b16 %v473
        %v749 = vunpack.c.l.b16 %v474
        %v750 = vunpack.c.l.b16 %v475
        %v751 = vunpack.c.h.b16 %v475
        %v752 = vunpack.c.l.b16 %v476
        %v753 = vunpack.c.l.b16 %v477
        %v754 = vunpack.c.h.b16 %v477
        %v755 = vunpack.c.l.b16 %v478
        %v756 = vunpack.c.l.b16 %v479
        %v757 = vunpack.c.h.b16 %v479
        %v758 = vunpack.c.l.b16 %v480
        %v759 = vunpack.c.l.b16 %v481
        %v760 = vunpack.c.h.b16 %v481
        %v761 = vunpack.c.l.b16 %v482
        %v762 = vunpack.c.l.b16 %v483
        %v763 = vunpack.c.h.b16 %v483
        %v764 = vunpack.c.l.b16 %v484
        %v765 = vunpack.c.l.b16 %v485
        %v766 = vunpack.c.h.b16 %v485
        %v767 = vunpack.c.l.b16 %v486
        %v768 = vunpack.c.l.b16 %v487
        %v769 = vunpack.c.h.b16 %v487
        %v770 = vunpack.c.l.b16 %v488
        %v771 = vunpack.c.l.b16 %v489
        %v772 = vunpack.c.h.b16 %v489
        %v773 = vunpack.c.l.b16 %v490
        %v774 = vunpack.c.l.b16 %v491
        %v775 = vunpack.c.h.b16 %v491
        %v776 = vunpack.c.l.b16 %v492
        %v777 = vunpack.c.l.b16 %v493
        %v778 = vunpack.c.h.b16 %v493
        %v779 = vunpack.c.l.b16 %v494
        %v780 = vunpack.c.l.b16 %v495
        %v781 = vunpack.c.h.b16 %v495
        %v782 = vunpack.c.l.b16 %v496
        %v783 = vunpack.c.l.b16 %v497
        %v784 = vunpack.c.h.b16 %v497
        %v785 = vunpack.c.l.b16 %v498
        %v786 = vunpack.c.l.b16 %v499
        %v787 = vunpack.c.h.b16 %v499
        %v788 = vunpack.c.l.b16 %v500
        %v789 = vunpack.c.l.b16 %v501
        %v790 = vunpack.c.h.b16 %v501
        %v791 = vunpack.c.l.b16 %v502
        %v792 = vunpack.c.l.b16 %v503
        %v793 = vunpack.c.h.b16 %v503
        %v794 = vunpack.c.l.b16 %v504
        %v795 = vunpack.c.l.b16 %v505
        %v796 = vunpack.c.h.b16 %v505
        %v797 = vunpack.c.l.b16 %v506
        %v798 = vunpack.c.l.b16 %v507
        %v799 = vunpack.c.h.b16 %v507
        %v800 = vunpack.c.l.b16 %v508
        %v801 = vunpack.c.l.b16 %v509
        %v802 = vunpack.c.h.b16 %v509
        %v803 = vunpack.c.l.b16 %v510
        %v804 = vunpack.c.l.b16 %v511
        %v805 = vunpack.c.h.b16 %v511
        %v806 = vunpack.c.l.b16 %v512
        %v807 = vunpack.c.l.b16 %v513
        %v808 = vunpack.c.h.b16 %v513
        %v809 = vunpack.c.l.b16 %v514
        %v810 = vunpack.c.l.b16 %v515
        %v811 = vunpack.c.h.b16 %v515
        %v812 = vunpack.c.l.b16 %v516
        %v813 = vunpack.c.l.b16 %v517
        %v814 = vunpack.c.h.b16 %v517
        %v815 = vunpack.c.l.b16 %v518
        %v816 = vunpack.c.l.b16 %v519
        %v817 = vunpack.c.h.b16 %v519
        %v818 = vunpack.c.l.b16 %v520
        %v819 = vunpack.c.l.b16 %v521
        %v820 = vunpack.c.h.b16 %v521
        %v821 = vunpack.c.l.b16 %v522
        %v822 = vunpack.c.l.b16 %v523
        %v823 = vunpack.c.h.b16 %v523
        %v824 = vunpack.c.l.b16 %v524
        %v825 = vunpack.c.l.b16 %v525
        %v826 = vunpack.c.h.b16 %v525
        %v827 = vunpack.c.l.b16 %v526
        %v828 = vunpack.c.l.b16 %v527
        %v829 = vunpack.c.h.b16 %v527
        %v830 = vunpack.c.l.b16 %v528
        %v831 = vunpack.c.l.b16 %v529
        %v832 = vunpack.c.h.b16 %v529
        %v833 = vunpack.c.l.b16 %v530
        %v834 = vunpack.c.l.b16 %v531
        %v835 = vunpack.c.h.b16 %v531
        %v836 = vunpack.c.l.b16 %v532
        %v837 = vunpack.c.l.b16 %v533
        %v838 = vunpack.c.h.b16 %v533
        %v839 = vunpack.c.l.b16 %v534
        %v840 = vunpack.c.l.b16 %v535
        %v841 = vunpack.c.h.b16 %v535
        %v842 = vunpack.c.l.b16 %v536
        %v843 = vunpack.c.l.b16 %v537
        %v844 = vunpack.c.h.b16 %v537
        %v845 = vunpack.c.l.b16 %v538
        %v846 = vunpack.c.l.b16 %v539
        %v847 = vunpack.c.h.b16 %v539
        %v848 = vunpack.c.l.b16 %v540
        %v849 = vunpack.c.l.b16 %v541
        %v850 = vunpack.c.h.b16 %v541
        %v851 = vunpack.c.l.b16 %v542
        %v852 = vunpack.c.l.b16 %v543
        %v853 = vunpack.c.h.b16 %v543
        %v854 = vunpack.c.l.b16 %v544
        %v855 = vunpack.c.l.b16 %v545
        %v856 = vunpack.c.h.b16 %v545
        %v857 = vunpack.c.l.b16 %v546
        %v858 = vunpack.c.l.b16 %v547
        %v859 = vunpack.c.h.b16 %v547
        %v860 = vunpack.c.l.b16 %v548
        %v861 = vunpack.c.l.b16 %v549
        %v862 = vunpack.c.h.b16 %v549
        %v863 = vunpack.c.l.b16 %v550
        %v864 = vunpack.c.l.b16 %v551
        %v865 = vunpack.c.h.b16 %v551
        %v866 = vunpack.c.l.b16 %v552
        %v867 = vunpack.c.l.b16 %v553
        %v868 = vunpack.c.h.b16 %v553
        %v869 = vunpack.c.l.b16 %v554
        %v870 = vunpack.c.l.b16 %v555
        %v871 = vunpack.c.h.b16 %v555
        %v872 = vunpack.c.l.b16 %v556
        %v873 = vunpack.c.l.b16 %v557
        %v874 = vunpack.c.h.b16 %v557
        %v875 = vunpack.c.l.b16 %v558
        %v876 = vunpack.c.l.b16 %v559
        %v877 = vunpack.c.h.b16 %v559
        %v878 = vunpack.c.l.b16 %v560
        %v879 = vunpack.c.l.b16 %v561
        %v880 = vunpack.c.h.b16 %v561
        %v881 = vunpack.c.l.b16 %v562
        %v882 = vunpack.c.l.b16 %v563
        %v883 = vunpack.c.h.b16 %v563
        %v884 = vunpack.c.l.b16 %v564
        %v885 = vunpack.c.l.b16 %v565
        %v886 = vunpack.c.h.b16 %v565
        %v887 = vunpack.c.l.b16 %v566
        %v888 = vunpack.c.l.b16 %v567
        %v889 = vunpack.c.h.b16 %v567
        %v890 = vunpack.c.l.b16 %v568
        %v891 = vunpack.c.l.b16 %v569
        %v892 = vunpack.c.h.b16 %v569
        %v893 = vunpack.c.l.b16 %v570
        %v894 = vunpack.c.l.b16 %v571
        %v895 = vunpack.c.h.b16 %v571
        %v896 = vunpack.c.l.b16 %v572
        %v897 = vunpack.c.l.b16 %v573
        %v898 = vunpack.c.h.b16 %v573
        %v899 = vunpack.c.l.b16 %v574
        %v900 = vunpack.c.l.b16 %v575
        %v901 = vunpack.c.h.b16 %v575
        %v902 = vunpack.c.l.b16 %v576
        %v903 = vunpack.c.l.b16 %v577
        %v904 = vunpack.c.h.b16 %v577
        %v905 = vunpack.c.l.b16 %v578
        %v906 = vunpack.c.l.b16 %v579
        %v907 = vunpack.c.h.b16 %v579
        %v908 = vunpack.c.l.b16 %v580
        %v909 = vpack.c.b16 %v720, %v717
        %v910 = vpack.c.b16 %v721, %v718
        %v911 = vpack.c.b16 %v722, %v719
        %v912 = vpack.c.b16 %v726, %v723
        %v913 = vpack.c.b16 %v727, %v724
        %v914 = vpack.c.b16 %v728, %v725
        %v915 = vpack.c.b16 %v732, %v729
        %v916 = vpack.c.b16 %v733, %v730
        %v917 = vpack.c.b16 %v734, %v731
        %v918 = vpack.c.b16 %v738, %v735
        %v919 = vpack.c.b16 %v739, %v736
        %v920 = vpack.c.b16 %v740, %v737
        %v921 = vpack.c.b16 %v744, %v741
        %v922 = vpack.c.b16 %v745, %v742
        %v923 = vpack.c.b16 %v746, %v743
        %v924 = vpack.c.b16 %v750, %v747
        %v925 = vpack.c.b16 %v751, %v748
        %v926 = vpack.c.b16 %v752, %v749
        %v927 = vpack.c.b16 %v756, %v753
        %v928 = vpack.c.b16 %v757, %v754
        %v929 = vpack.c.b16 %v758, %v755
        %v930 = vpack.c.b16 %v762, %v759
        %v931 = vpack.c.b16 %v763, %v760
        %v932 = vpack.c.b16 %v764, %v761
        %v933 = vpack.c.b16 %v768, %v765
        %v934 = vpack.c.b16 %v769, %v766
        %v935 = vpack.c.b16 %v770, %v767
        %v936 = vpack.c.b16 %v774, %v771
        %v937 = vpack.c.b16 %v775, %v772
        %v938 = vpack.c.b16 %v776, %v773
        %v939 = vpack.c.b16 %v780, %v777
        %v940 = vpack.c.b16 %v781, %v778
        %v941 = vpack.c.b16 %v782, %v779
        %v942 = vpack.c.b16 %v786, %v783
        %v943 = vpack.c.b16 %v787, %v784
        %v944 = vpack.c.b16 %v788, %v785
        %v945 = vpack.c.b16 %v792, %v789
        %v946 = vpack.c.b16 %v793, %v790
        %v947 = vpack.c.b16 %v794, %v791
        %v948 = vpack.c.b16 %v798, %v795
        %v949 = vpack.c.b16 %v799, %v796
        %v950 = vpack.c.b16 %v800, %v797
        %v951 = vpack.c.b16 %v804, %v801
        %v952 = vpack.c.b16 %v805, %v802
        %v953 = vpack.c.b16 %v806, %v803
        %v954 = vpack.c.b16 %v810, %v807
        %v955 = vpack.c.b16 %v811, %v808
        %v956 = vpack.c.b16 %v812, %v809
        %v957 = vpack.c.b16 %v816, %v813
        %v958 = vpack.c.b16 %v817, %v814
        %v959 = vpack.c.b16 %v818, %v815
        %v960 = vpack.c.b16 %v822, %v819
        %v961 = vpack.c.b16 %v823, %v820
        %v962 = vpack.c.b16 %v824, %v821
        %v963 = vpack.c.b16 %v828, %v825
        %v964 = vpack.c.b16 %v829, %v826
        %v965 = vpack.c.b16 %v830, %v827
        %v966 = vpack.c.b16 %v834, %v831
        %v967 = vpack.c.b16 %v835, %v832
        %v968 = vpack.c.b16 %v836, %v833
        %v969 = vpack.c.b16 %v840, %v837
        %v970 = vpack.c.b16 %v841, %v838
        %v971 = vpack.c.b16 %v842, %v839
        %v972 = vpack.c.b16 %v846, %v843
        %v973 = vpack.c.b16 %v847, %v844
        %v974 = vpack.c.b16 %v848, %v845
        %v975 = vpack.c.b16 %v852, %v849
        %v976 = vpack.c.b16 %v853, %v850
        %v977 = vpack.c.b16 %v854, %v851
        %v978 = vpack.c.b16 %v858, %v855
        %v979 = vpack.c.b16 %v859, %v856
        %v980 = vpack.c.b16 %v860, %v857
        %v981 = vpack.c.b16 %v864, %v861
        %v982 = vpack.c.b16 %v865, %v862
        %v983 = vpack.c.b16 %v866, %v863
        %v984 = vpack.c.b16 %v870, %v867
        %v985 = vpack.c.b16 %v871, %v868
        %v986 = vpack.c.b16 %v872, %v869
        %v987 = vpack.c.b16 %v876, %v873
        %v988 = vpack.c.b16 %v877, %v874
        %v989 = vpack.c.b16 %v878, %v875
        %v990 = vpack.c.b16 %v882, %v879
        %v991 = vpack.c.b16 %v883, %v880
        %v992 = vpack.c.b16 %v884, %v881
        %v993 = vpack.c.b16 %v888, %v885
        %v994 = vpack.c.b16 %v889, %v886
        %v995 = vpack.c.b16 %v890, %v887
        %v996 = vpack.c.b16 %v894, %v891
        %v997 = vpack.c.b16 %v895, %v892
        %v998 = vpack.c.b16 %v896, %v893
        %v999 = vpack.c.b16 %v900, %v897
        %v1000 = vpack.c.b16 %v901, %v898
        %v1001 = vpack.c.b16 %v902, %v899
        %v1002 = vpack.c.b16 %v906, %v903
        %v1003 = vpack.c.b16 %v907, %v904
        %v1004 = vpack.c.b16 %v908, %v905
        %1101 = vmatpush.bf16.msra.mxu0 %v930
        %1102 = vmatpush.bf16.msra.mxu0 %v927
        %1103 = vmatpush.bf16.msra.mxu0 %v924
        %1104 = vmatpush.bf16.msra.mxu0 %v921
        %1105 = vmatpush.bf16.msra.mxu0 %v918
        %1106 = vmatpush.bf16.msra.mxu0 %v915
        %1107 = vmatpush.bf16.msra.mxu0 %v912
        %1108 = vmatpush.bf16.msra.mxu0 %v909
        %1109 = vmatmul.bf16.gmra.mxu0 %v389
        %v1110 = vpop.f32.mrf.mxu0
        %v1111 = vadd.f32 %v583, %v1110
        %v1112 = vpop.f32.mrf.mxu0
        %v1113 = vadd.f32 %v583, %v1112
        %1114 = vmatmul.bf16.gmra.mxu0 %v390
        %v1115 = vpop.f32.mrf.mxu0
        %v1116 = vadd.f32 %v583, %v1115
        %v1117 = vpop.f32.mrf.mxu0
        %v1118 = vadd.f32 %v583, %v1117
        %1119 = vmatmul.bf16.gmra.mxu0 %v391
        %v1120 = vpop.f32.mrf.mxu0
        %v1121 = vadd.f32 %v583, %v1120
        %v1122 = vpop.f32.mrf.mxu0
        %v1123 = vadd.f32 %v583, %v1122
        %1124 = vmatmul.bf16.gmra.mxu0 %v392
        %v1125 = vpop.f32.mrf.mxu0
        %v1126 = vadd.f32 %v583, %v1125
        %v1127 = vpop.f32.mrf.mxu0
        %v1128 = vadd.f32 %v583, %v1127
        %1129 = vmatmul.bf16.gmra.mxu0 %v393
        %v1130 = vpop.f32.mrf.mxu0
        %v1131 = vadd.f32 %v583, %v1130
        %v1132 = vpop.f32.mrf.mxu0
        %v1133 = vadd.f32 %v583, %v1132
        %1134 = vmatmul.bf16.gmra.mxu0 %v394
        %v1135 = vpop.f32.mrf.mxu0
        %v1136 = vadd.f32 %v583, %v1135
        %v1137 = vpop.f32.mrf.mxu0
        %v1138 = vadd.f32 %v583, %v1137
        %1139 = vmatmul.bf16.gmra.mxu0 %v395
        %v1140 = vpop.f32.mrf.mxu0
        %v1141 = vadd.f32 %v583, %v1140
        %v1142 = vpop.f32.mrf.mxu0
        %v1143 = vadd.f32 %v583, %v1142
        %1144 = vmatmul.bf16.gmra.mxu0 %v396
        %v1145 = vpop.f32.mrf.mxu0
        %v1146 = vadd.f32 %v583, %v1145
        %v1147 = vpop.f32.mrf.mxu0
        %v1148 = vadd.f32 %v583, %v1147
        %1149 = vmatmul.bf16.gmra.mxu0 %v397
        %v1150 = vpop.f32.mrf.mxu0
        %v1151 = vadd.f32 %v583, %v1150
        %v1152 = vpop.f32.mrf.mxu0
        %v1153 = vadd.f32 %v583, %v1152
        %1154 = vmatmul.bf16.gmra.mxu0 %v398
        %v1155 = vpop.f32.mrf.mxu0
        %v1156 = vadd.f32 %v583, %v1155
        %v1157 = vpop.f32.mrf.mxu0
        %v1158 = vadd.f32 %v583, %v1157
        %1159 = vmatmul.bf16.gmra.mxu0 %v399
        %v1160 = vpop.f32.mrf.mxu0
        %v1161 = vadd.f32 %v583, %v1160
        %v1162 = vpop.f32.mrf.mxu0
        %v1163 = vadd.f32 %v583, %v1162
        %1164 = vmatmul.bf16.gmra.mxu0 %v400
        %v1165 = vpop.f32.mrf.mxu0
        %v1166 = vadd.f32 %v583, %v1165
        %v1167 = vpop.f32.mrf.mxu0
        %v1168 = vadd.f32 %v583, %v1167
        %1169 = vmatmul.bf16.gmra.mxu0 %v401
        %v1170 = vpop.f32.mrf.mxu0
        %v1171 = vadd.f32 %v583, %v1170
        %v1172 = vpop.f32.mrf.mxu0
        %v1173 = vadd.f32 %v583, %v1172
        %1174 = vmatmul.bf16.gmra.mxu0 %v402
        %v1175 = vpop.f32.mrf.mxu0
        %v1176 = vadd.f32 %v583, %v1175
        %v1177 = vpop.f32.mrf.mxu0
        %v1178 = vadd.f32 %v583, %v1177
        %1179 = vdwg.mxu0
        %1180 = vmatpush.bf16.msra.mxu0 %v954
        %1181 = vmatpush.bf16.msra.mxu0 %v951
        %1182 = vmatpush.bf16.msra.mxu0 %v948
        %1183 = vmatpush.bf16.msra.mxu0 %v945
        %1184 = vmatpush.bf16.msra.mxu0 %v942
        %1185 = vmatpush.bf16.msra.mxu0 %v939
        %1186 = vmatpush.bf16.msra.mxu0 %v936
        %1187 = vmatpush.bf16.msra.mxu0 %v933
        %1188 = vmatmul.bf16.gmra.mxu0 %v391
        %v1189 = vpop.f32.mrf.mxu0
        %v1190 = vadd.f32 %v1111, %v1189
        %v1191 = vpop.f32.mrf.mxu0
        %v1192 = vadd.f32 %v1113, %v1191
        %1193 = vmatmul.bf16.gmra.mxu0 %v392
        %v1194 = vpop.f32.mrf.mxu0
        %v1195 = vadd.f32 %v1116, %v1194
        %v1196 = vpop.f32.mrf.mxu0
        %v1197 = vadd.f32 %v1118, %v1196
        %1198 = vmatmul.bf16.gmra.mxu0 %v393
        %v1199 = vpop.f32.mrf.mxu0
        %v1200 = vadd.f32 %v1121, %v1199
        %v1201 = vpop.f32.mrf.mxu0
        %v1202 = vadd.f32 %v1123, %v1201
        %1203 = vmatmul.bf16.gmra.mxu0 %v394
        %v1204 = vpop.f32.mrf.mxu0
        %v1205 = vadd.f32 %v1126, %v1204
        %v1206 = vpop.f32.mrf.mxu0
        %v1207 = vadd.f32 %v1128, %v1206
        %1208 = vmatmul.bf16.gmra.mxu0 %v395
        %v1209 = vpop.f32.mrf.mxu0
        %v1210 = vadd.f32 %v1131, %v1209
        %v1211 = vpop.f32.mrf.mxu0
        %v1212 = vadd.f32 %v1133, %v1211
        %1213 = vmatmul.bf16.gmra.mxu0 %v396
        %v1214 = vpop.f32.mrf.mxu0
        %v1215 = vadd.f32 %v1136, %v1214
        %v1216 = vpop.f32.mrf.mxu0
        %v1217 = vadd.f32 %v1138, %v1216
        %1218 = vmatmul.bf16.gmra.mxu0 %v397
        %v1219 = vpop.f32.mrf.mxu0
        %v1220 = vadd.f32 %v1141, %v1219
        %v1221 = vpop.f32.mrf.mxu0
        %v1222 = vadd.f32 %v1143, %v1221
        %1223 = vmatmul.bf16.gmra.mxu0 %v398
        %v1224 = vpop.f32.mrf.mxu0
        %v1225 = vadd.f32 %v1146, %v1224
        %v1226 = vpop.f32.mrf.mxu0
        %v1227 = vadd.f32 %v1148, %v1226
        %1228 = vmatmul.bf16.gmra.mxu0 %v399
        %v1229 = vpop.f32.mrf.mxu0
        %v1230 = vadd.f32 %v1151, %v1229
        %v1231 = vpop.f32.mrf.mxu0
        %v1232 = vadd.f32 %v1153, %v1231
        %1233 = vmatmul.bf16.gmra.mxu0 %v400
        %v1234 = vpop.f32.mrf.mxu0
        %v1235 = vadd.f32 %v1156, %v1234
        %v1236 = vpop.f32.mrf.mxu0
        %v1237 = vadd.f32 %v1158, %v1236
        %1238 = vmatmul.bf16.gmra.mxu0 %v401
        %v1239 = vpop.f32.mrf.mxu0
        %v1240 = vadd.f32 %v1161, %v1239
        %v1241 = vpop.f32.mrf.mxu0
        %v1242 = vadd.f32 %v1163, %v1241
        %1243 = vmatmul.bf16.gmra.mxu0 %v402
        %v1244 = vpop.f32.mrf.mxu0
        %v1245 = vadd.f32 %v1166, %v1244
        %v1246 = vpop.f32.mrf.mxu0
        %v1247 = vadd.f32 %v1168, %v1246
        %1248 = vmatmul.bf16.gmra.mxu0 %v425
        %v1249 = vpop.f32.mrf.mxu0
        %v1250 = vadd.f32 %v1171, %v1249
        %v1251 = vpop.f32.mrf.mxu0
        %v1252 = vadd.f32 %v1173, %v1251
        %1253 = vmatmul.bf16.gmra.mxu0 %v426
        %v1254 = vpop.f32.mrf.mxu0
        %v1255 = vadd.f32 %v1176, %v1254
        %v1256 = vpop.f32.mrf.mxu0
        %v1257 = vadd.f32 %v1178, %v1256
        %1258 = vdwg.mxu0
        %1259 = vmatpush.bf16.msra.mxu0 %v978
        %1260 = vmatpush.bf16.msra.mxu0 %v975
        %1261 = vmatpush.bf16.msra.mxu0 %v972
        %1262 = vmatpush.bf16.msra.mxu0 %v969
        %1263 = vmatpush.bf16.msra.mxu0 %v966
        %1264 = vmatpush.bf16.msra.mxu0 %v963
        %1265 = vmatpush.bf16.msra.mxu0 %v960
        %1266 = vmatpush.bf16.msra.mxu0 %v957
        %1267 = vmatmul.bf16.gmra.mxu0 %v393
        %v1268 = vpop.f32.mrf.mxu0
        %v1269 = vadd.f32 %v1190, %v1268
        %v1270 = vpop.f32.mrf.mxu0
        %v1271 = vadd.f32 %v1192, %v1270
        %1272 = vmatmul.bf16.gmra.mxu0 %v394
        %v1273 = vpop.f32.mrf.mxu0
        %v1274 = vadd.f32 %v1195, %v1273
        %v1275 = vpop.f32.mrf.mxu0
        %v1276 = vadd.f32 %v1197, %v1275
        %1277 = vmatmul.bf16.gmra.mxu0 %v395
        %v1278 = vpop.f32.mrf.mxu0
        %v1279 = vadd.f32 %v1200, %v1278
        %v1280 = vpop.f32.mrf.mxu0
        %v1281 = vadd.f32 %v1202, %v1280
        %1282 = vmatmul.bf16.gmra.mxu0 %v396
        %v1283 = vpop.f32.mrf.mxu0
        %v1284 = vadd.f32 %v1205, %v1283
        %v1285 = vpop.f32.mrf.mxu0
        %v1286 = vadd.f32 %v1207, %v1285
        %1287 = vmatmul.bf16.gmra.mxu0 %v397
        %v1288 = vpop.f32.mrf.mxu0
        %v1289 = vadd.f32 %v1210, %v1288
        %v1290 = vpop.f32.mrf.mxu0
        %v1291 = vadd.f32 %v1212, %v1290
        %1292 = vmatmul.bf16.gmra.mxu0 %v398
        %v1293 = vpop.f32.mrf.mxu0
        %v1294 = vadd.f32 %v1215, %v1293
        %v1295 = vpop.f32.mrf.mxu0
        %v1296 = vadd.f32 %v1217, %v1295
        %1297 = vmatmul.bf16.gmra.mxu0 %v399
        %v1298 = vpop.f32.mrf.mxu0
        %v1299 = vadd.f32 %v1220, %v1298
        %v1300 = vpop.f32.mrf.mxu0
        %v1301 = vadd.f32 %v1222, %v1300
        %1302 = vmatmul.bf16.gmra.mxu0 %v400
        %v1303 = vpop.f32.mrf.mxu0
        %v1304 = vadd.f32 %v1225, %v1303
        %v1305 = vpop.f32.mrf.mxu0
        %v1306 = vadd.f32 %v1227, %v1305
        %1307 = vmatmul.bf16.gmra.mxu0 %v401
        %v1308 = vpop.f32.mrf.mxu0
        %v1309 = vadd.f32 %v1230, %v1308
        %v1310 = vpop.f32.mrf.mxu0
        %v1311 = vadd.f32 %v1232, %v1310
        %1312 = vmatmul.bf16.gmra.mxu0 %v402
        %v1313 = vpop.f32.mrf.mxu0
        %v1314 = vadd.f32 %v1235, %v1313
        %v1315 = vpop.f32.mrf.mxu0
        %v1316 = vadd.f32 %v1237, %v1315
        %1317 = vmatmul.bf16.gmra.mxu0 %v425
        %v1318 = vpop.f32.mrf.mxu0
        %v1319 = vadd.f32 %v1240, %v1318
        %v1320 = vpop.f32.mrf.mxu0
        %v1321 = vadd.f32 %v1242, %v1320
        %1322 = vmatmul.bf16.gmra.mxu0 %v426
        %v1323 = vpop.f32.mrf.mxu0
        %v1324 = vadd.f32 %v1245, %v1323
        %v1325 = vpop.f32.mrf.mxu0
        %v1326 = vadd.f32 %v1247, %v1325
        %1327 = vmatmul.bf16.gmra.mxu0 %v437
        %v1328 = vpop.f32.mrf.mxu0
        %v1329 = vadd.f32 %v1250, %v1328
        %v1330 = vpop.f32.mrf.mxu0
        %v1331 = vadd.f32 %v1252, %v1330
        %1332 = vmatmul.bf16.gmra.mxu0 %v438
        %v1333 = vpop.f32.mrf.mxu0
        %v1334 = vadd.f32 %v1255, %v1333
        %v1335 = vpop.f32.mrf.mxu0
        %v1336 = vadd.f32 %v1257, %v1335
        %1337 = vdwg.mxu0
        %1338 = vmatpush.bf16.msra.mxu0 %v1002
        %1339 = vmatpush.bf16.msra.mxu0 %v999
        %1340 = vmatpush.bf16.msra.mxu0 %v996
        %1341 = vmatpush.bf16.msra.mxu0 %v993
        %1342 = vmatpush.bf16.msra.mxu0 %v990
        %1343 = vmatpush.bf16.msra.mxu0 %v987
        %1344 = vmatpush.bf16.msra.mxu0 %v984
        %1345 = vmatpush.bf16.msra.mxu0 %v981
        %1346 = vmatmul.bf16.gmra.mxu0 %v395
        %v1347 = vpop.f32.mrf.mxu0
        %v1348 = vadd.f32 %v1269, %v1347
        %v1349 = vpop.f32.mrf.mxu0
        %v1350 = vadd.f32 %v1271, %v1349
        %1351 = vmatmul.bf16.gmra.mxu0 %v396
        %v1352 = vpop.f32.mrf.mxu0
        %v1353 = vadd.f32 %v1274, %v1352
        %v1354 = vpop.f32.mrf.mxu0
        %v1355 = vadd.f32 %v1276, %v1354
        %1356 = vmatmul.bf16.gmra.mxu0 %v397
        %v1357 = vpop.f32.mrf.mxu0
        %v1358 = vadd.f32 %v1279, %v1357
        %v1359 = vpop.f32.mrf.mxu0
        %v1360 = vadd.f32 %v1281, %v1359
        %1361 = vmatmul.bf16.gmra.mxu0 %v398
        %v1362 = vpop.f32.mrf.mxu0
        %v1363 = vadd.f32 %v1284, %v1362
        %v1364 = vpop.f32.mrf.mxu0
        %v1365 = vadd.f32 %v1286, %v1364
        %1366 = vmatmul.bf16.gmra.mxu0 %v399
        %v1367 = vpop.f32.mrf.mxu0
        %v1368 = vadd.f32 %v1289, %v1367
        %v1369 = vpop.f32.mrf.mxu0
        %v1370 = vadd.f32 %v1291, %v1369
        %1371 = vmatmul.bf16.gmra.mxu0 %v400
        %v1372 = vpop.f32.mrf.mxu0
        %v1373 = vadd.f32 %v1294, %v1372
        %v1374 = vpop.f32.mrf.mxu0
        %v1375 = vadd.f32 %v1296, %v1374
        %1376 = vmatmul.bf16.gmra.mxu0 %v401
        %v1377 = vpop.f32.mrf.mxu0
        %v1378 = vadd.f32 %v1299, %v1377
        %v1379 = vpop.f32.mrf.mxu0
        %v1380 = vadd.f32 %v1301, %v1379
        %1381 = vmatmul.bf16.gmra.mxu0 %v402
        %v1382 = vpop.f32.mrf.mxu0
        %v1383 = vadd.f32 %v1304, %v1382
        %v1384 = vpop.f32.mrf.mxu0
        %v1385 = vadd.f32 %v1306, %v1384
        %1386 = vmatmul.bf16.gmra.mxu0 %v425
        %v1387 = vpop.f32.mrf.mxu0
        %v1388 = vadd.f32 %v1309, %v1387
        %v1389 = vpop.f32.mrf.mxu0
        %v1390 = vadd.f32 %v1311, %v1389
        %1391 = vmatmul.bf16.gmra.mxu0 %v426
        %v1392 = vpop.f32.mrf.mxu0
        %v1393 = vadd.f32 %v1314, %v1392
        %v1394 = vpop.f32.mrf.mxu0
        %v1395 = vadd.f32 %v1316, %v1394
        %1396 = vmatmul.bf16.gmra.mxu0 %v437
        %v1397 = vpop.f32.mrf.mxu0
        %v1398 = vadd.f32 %v1319, %v1397
        %v1399 = vpop.f32.mrf.mxu0
        %v1400 = vadd.f32 %v1321, %v1399
        %1401 = vmatmul.bf16.gmra.mxu0 %v438
        %v1402 = vpop.f32.mrf.mxu0
        %v1403 = vadd.f32 %v1324, %v1402
        %v1404 = vpop.f32.mrf.mxu0
        %v1405 = vadd.f32 %v1326, %v1404
        %1406 = vmatmul.bf16.gmra.mxu0 %v449
        %v1407 = vpop.f32.mrf.mxu0
        %v1408 = vadd.f32 %v1329, %v1407
        %v1409 = vpop.f32.mrf.mxu0
        %v1410 = vadd.f32 %v1331, %v1409
        %1411 = vmatmul.bf16.gmra.mxu0 %v450
        %v1412 = vpop.f32.mrf.mxu0
        %v1413 = vadd.f32 %v1334, %v1412
        %v1414 = vpop.f32.mrf.mxu0
        %v1415 = vadd.f32 %v1336, %v1414
        %1416 = vdwg.mxu0
        %1417 = vmatpush.bf16.msra.mxu0 %v931
        %1418 = vmatpush.bf16.msra.mxu0 %v928
        %1419 = vmatpush.bf16.msra.mxu0 %v925
        %1420 = vmatpush.bf16.msra.mxu0 %v922
        %1421 = vmatpush.bf16.msra.mxu0 %v919
        %1422 = vmatpush.bf16.msra.mxu0 %v916
        %1423 = vmatpush.bf16.msra.mxu0 %v913
        %1424 = vmatpush.bf16.msra.mxu0 %v910
        %1425 = vmatmul.bf16.gmra.mxu0 %v389
        %v1426 = vpop.f32.mrf.mxu0
        %v1427 = vadd.f32 %v584, %v1426
        %v1428 = vpop.f32.mrf.mxu0
        %v1429 = vadd.f32 %v584, %v1428
        %1430 = vmatmul.bf16.gmra.mxu0 %v390
        %v1431 = vpop.f32.mrf.mxu0
        %v1432 = vadd.f32 %v584, %v1431
        %v1433 = vpop.f32.mrf.mxu0
        %v1434 = vadd.f32 %v584, %v1433
        %1435 = vmatmul.bf16.gmra.mxu0 %v391
        %v1436 = vpop.f32.mrf.mxu0
        %v1437 = vadd.f32 %v584, %v1436
        %v1438 = vpop.f32.mrf.mxu0
        %v1439 = vadd.f32 %v584, %v1438
        %1440 = vmatmul.bf16.gmra.mxu0 %v392
        %v1441 = vpop.f32.mrf.mxu0
        %v1442 = vadd.f32 %v584, %v1441
        %v1443 = vpop.f32.mrf.mxu0
        %v1444 = vadd.f32 %v584, %v1443
        %1445 = vmatmul.bf16.gmra.mxu0 %v393
        %v1446 = vpop.f32.mrf.mxu0
        %v1447 = vadd.f32 %v584, %v1446
        %v1448 = vpop.f32.mrf.mxu0
        %v1449 = vadd.f32 %v584, %v1448
        %1450 = vmatmul.bf16.gmra.mxu0 %v394
        %v1451 = vpop.f32.mrf.mxu0
        %v1452 = vadd.f32 %v584, %v1451
        %v1453 = vpop.f32.mrf.mxu0
        %v1454 = vadd.f32 %v584, %v1453
        %1455 = vmatmul.bf16.gmra.mxu0 %v395
        %v1456 = vpop.f32.mrf.mxu0
        %v1457 = vadd.f32 %v584, %v1456
        %v1458 = vpop.f32.mrf.mxu0
        %v1459 = vadd.f32 %v584, %v1458
        %1460 = vmatmul.bf16.gmra.mxu0 %v396
        %v1461 = vpop.f32.mrf.mxu0
        %v1462 = vadd.f32 %v584, %v1461
        %v1463 = vpop.f32.mrf.mxu0
        %v1464 = vadd.f32 %v584, %v1463
        %1465 = vmatmul.bf16.gmra.mxu0 %v397
        %v1466 = vpop.f32.mrf.mxu0
        %v1467 = vadd.f32 %v584, %v1466
        %v1468 = vpop.f32.mrf.mxu0
        %v1469 = vadd.f32 %v584, %v1468
        %1470 = vmatmul.bf16.gmra.mxu0 %v398
        %v1471 = vpop.f32.mrf.mxu0
        %v1472 = vadd.f32 %v584, %v1471
        %v1473 = vpop.f32.mrf.mxu0
        %v1474 = vadd.f32 %v584, %v1473
        %1475 = vmatmul.bf16.gmra.mxu0 %v399
        %v1476 = vpop.f32.mrf.mxu0
        %v1477 = vadd.f32 %v584, %v1476
        %v1478 = vpop.f32.mrf.mxu0
        %v1479 = vadd.f32 %v584, %v1478
        %1480 = vmatmul.bf16.gmra.mxu0 %v400
        %v1481 = vpop.f32.mrf.mxu0
        %v1482 = vadd.f32 %v584, %v1481
        %v1483 = vpop.f32.mrf.mxu0
        %v1484 = vadd.f32 %v584, %v1483
        %1485 = vmatmul.bf16.gmra.mxu0 %v401
        %v1486 = vpop.f32.mrf.mxu0
        %v1487 = vadd.f32 %v584, %v1486
        %v1488 = vpop.f32.mrf.mxu0
        %v1489 = vadd.f32 %v584, %v1488
        %1490 = vmatmul.bf16.gmra.mxu0 %v402
        %v1491 = vpop.f32.mrf.mxu0
        %v1492 = vadd.f32 %v584, %v1491
        %v1493 = vpop.f32.mrf.mxu0
        %v1494 = vadd.f32 %v584, %v1493
        %1495 = vdwg.mxu0
        %1496 = vmatpush.bf16.msra.mxu0 %v955
        %1497 = vmatpush.bf16.msra.mxu0 %v952
        %1498 = vmatpush.bf16.msra.mxu0 %v949
        %1499 = vmatpush.bf16.msra.mxu0 %v946
        %1500 = vmatpush.bf16.msra.mxu0 %v943
        %1501 = vmatpush.bf16.msra.mxu0 %v940
        %1502 = vmatpush.bf16.msra.mxu0 %v937
        %1503 = vmatpush.bf16.msra.mxu0 %v934
        %1504 = vmatmul.bf16.gmra.mxu0 %v391
        %v1505 = vpop.f32.mrf.mxu0
        %v1506 = vadd.f32 %v1427, %v1505
        %v1507 = vpop.f32.mrf.mxu0
        %v1508 = vadd.f32 %v1429, %v1507
        %1509 = vmatmul.bf16.gmra.mxu0 %v392
        %v1510 = vpop.f32.mrf.mxu0
        %v1511 = vadd.f32 %v1432, %v1510
        %v1512 = vpop.f32.mrf.mxu0
        %v1513 = vadd.f32 %v1434, %v1512
        %1514 = vmatmul.bf16.gmra.mxu0 %v393
        %v1515 = vpop.f32.mrf.mxu0
        %v1516 = vadd.f32 %v1437, %v1515
        %v1517 = vpop.f32.mrf.mxu0
        %v1518 = vadd.f32 %v1439, %v1517
        %1519 = vmatmul.bf16.gmra.mxu0 %v394
        %v1520 = vpop.f32.mrf.mxu0
        %v1521 = vadd.f32 %v1442, %v1520
        %v1522 = vpop.f32.mrf.mxu0
        %v1523 = vadd.f32 %v1444, %v1522
        %1524 = vmatmul.bf16.gmra.mxu0 %v395
        %v1525 = vpop.f32.mrf.mxu0
        %v1526 = vadd.f32 %v1447, %v1525
        %v1527 = vpop.f32.mrf.mxu0
        %v1528 = vadd.f32 %v1449, %v1527
        %1529 = vmatmul.bf16.gmra.mxu0 %v396
        %v1530 = vpop.f32.mrf.mxu0
        %v1531 = vadd.f32 %v1452, %v1530
        %v1532 = vpop.f32.mrf.mxu0
        %v1533 = vadd.f32 %v1454, %v1532
        %1534 = vmatmul.bf16.gmra.mxu0 %v397
        %v1535 = vpop.f32.mrf.mxu0
        %v1536 = vadd.f32 %v1457, %v1535
        %v1537 = vpop.f32.mrf.mxu0
        %v1538 = vadd.f32 %v1459, %v1537
        %1539 = vmatmul.bf16.gmra.mxu0 %v398
        %v1540 = vpop.f32.mrf.mxu0
        %v1541 = vadd.f32 %v1462, %v1540
        %v1542 = vpop.f32.mrf.mxu0
        %v1543 = vadd.f32 %v1464, %v1542
        %1544 = vmatmul.bf16.gmra.mxu0 %v399
        %v1545 = vpop.f32.mrf.mxu0
        %v1546 = vadd.f32 %v1467, %v1545
        %v1547 = vpop.f32.mrf.mxu0
        %v1548 = vadd.f32 %v1469, %v1547
        %1549 = vmatmul.bf16.gmra.mxu0 %v400
        %v1550 = vpop.f32.mrf.mxu0
        %v1551 = vadd.f32 %v1472, %v1550
        %v1552 = vpop.f32.mrf.mxu0
        %v1553 = vadd.f32 %v1474, %v1552
        %1554 = vmatmul.bf16.gmra.mxu0 %v401
        %v1555 = vpop.f32.mrf.mxu0
        %v1556 = vadd.f32 %v1477, %v1555
        %v1557 = vpop.f32.mrf.mxu0
        %v1558 = vadd.f32 %v1479, %v1557
        %1559 = vmatmul.bf16.gmra.mxu0 %v402
        %v1560 = vpop.f32.mrf.mxu0
        %v1561 = vadd.f32 %v1482, %v1560
        %v1562 = vpop.f32.mrf.mxu0
        %v1563 = vadd.f32 %v1484, %v1562
        %1564 = vmatmul.bf16.gmra.mxu0 %v425
        %v1565 = vpop.f32.mrf.mxu0
        %v1566 = vadd.f32 %v1487, %v1565
        %v1567 = vpop.f32.mrf.mxu0
        %v1568 = vadd.f32 %v1489, %v1567
        %1569 = vmatmul.bf16.gmra.mxu0 %v426
        %v1570 = vpop.f32.mrf.mxu0
        %v1571 = vadd.f32 %v1492, %v1570
        %v1572 = vpop.f32.mrf.mxu0
        %v1573 = vadd.f32 %v1494, %v1572
        %1574 = vdwg.mxu0
        %1575 = vmatpush.bf16.msra.mxu0 %v979
        %1576 = vmatpush.bf16.msra.mxu0 %v976
        %1577 = vmatpush.bf16.msra.mxu0 %v973
        %1578 = vmatpush.bf16.msra.mxu0 %v970
        %1579 = vmatpush.bf16.msra.mxu0 %v967
        %1580 = vmatpush.bf16.msra.mxu0 %v964
        %1581 = vmatpush.bf16.msra.mxu0 %v961
        %1582 = vmatpush.bf16.msra.mxu0 %v958
        %1583 = vmatmul.bf16.gmra.mxu0 %v393
        %v1584 = vpop.f32.mrf.mxu0
        %v1585 = vadd.f32 %v1506, %v1584
        %v1586 = vpop.f32.mrf.mxu0
        %v1587 = vadd.f32 %v1508, %v1586
        %1588 = vmatmul.bf16.gmra.mxu0 %v394
        %v1589 = vpop.f32.mrf.mxu0
        %v1590 = vadd.f32 %v1511, %v1589
        %v1591 = vpop.f32.mrf.mxu0
        %v1592 = vadd.f32 %v1513, %v1591
        %1593 = vmatmul.bf16.gmra.mxu0 %v395
        %v1594 = vpop.f32.mrf.mxu0
        %v1595 = vadd.f32 %v1516, %v1594
        %v1596 = vpop.f32.mrf.mxu0
        %v1597 = vadd.f32 %v1518, %v1596
        %1598 = vmatmul.bf16.gmra.mxu0 %v396
        %v1599 = vpop.f32.mrf.mxu0
        %v1600 = vadd.f32 %v1521, %v1599
        %v1601 = vpop.f32.mrf.mxu0
        %v1602 = vadd.f32 %v1523, %v1601
        %1603 = vmatmul.bf16.gmra.mxu0 %v397
        %v1604 = vpop.f32.mrf.mxu0
        %v1605 = vadd.f32 %v1526, %v1604
        %v1606 = vpop.f32.mrf.mxu0
        %v1607 = vadd.f32 %v1528, %v1606
        %1608 = vmatmul.bf16.gmra.mxu0 %v398
        %v1609 = vpop.f32.mrf.mxu0
        %v1610 = vadd.f32 %v1531, %v1609
        %v1611 = vpop.f32.mrf.mxu0
        %v1612 = vadd.f32 %v1533, %v1611
        %1613 = vmatmul.bf16.gmra.mxu0 %v399
        %v1614 = vpop.f32.mrf.mxu0
        %v1615 = vadd.f32 %v1536, %v1614
        %v1616 = vpop.f32.mrf.mxu0
        %v1617 = vadd.f32 %v1538, %v1616
        %1618 = vmatmul.bf16.gmra.mxu0 %v400
        %v1619 = vpop.f32.mrf.mxu0
        %v1620 = vadd.f32 %v1541, %v1619
        %v1621 = vpop.f32.mrf.mxu0
        %v1622 = vadd.f32 %v1543, %v1621
        %1623 = vmatmul.bf16.gmra.mxu0 %v401
        %v1624 = vpop.f32.mrf.mxu0
        %v1625 = vadd.f32 %v1546, %v1624
        %v1626 = vpop.f32.mrf.mxu0
        %v1627 = vadd.f32 %v1548, %v1626
        %1628 = vmatmul.bf16.gmra.mxu0 %v402
        %v1629 = vpop.f32.mrf.mxu0
        %v1630 = vadd.f32 %v1551, %v1629
        %v1631 = vpop.f32.mrf.mxu0
        %v1632 = vadd.f32 %v1553, %v1631
        %1633 = vmatmul.bf16.gmra.mxu0 %v425
        %v1634 = vpop.f32.mrf.mxu0
        %v1635 = vadd.f32 %v1556, %v1634
        %v1636 = vpop.f32.mrf.mxu0
        %v1637 = vadd.f32 %v1558, %v1636
        %1638 = vmatmul.bf16.gmra.mxu0 %v426
        %v1639 = vpop.f32.mrf.mxu0
        %v1640 = vadd.f32 %v1561, %v1639
        %v1641 = vpop.f32.mrf.mxu0
        %v1642 = vadd.f32 %v1563, %v1641
        %1643 = vmatmul.bf16.gmra.mxu0 %v437
        %v1644 = vpop.f32.mrf.mxu0
        %v1645 = vadd.f32 %v1566, %v1644
        %v1646 = vpop.f32.mrf.mxu0
        %v1647 = vadd.f32 %v1568, %v1646
        %1648 = vmatmul.bf16.gmra.mxu0 %v438
        %v1649 = vpop.f32.mrf.mxu0
        %v1650 = vadd.f32 %v1571, %v1649
        %v1651 = vpop.f32.mrf.mxu0
        %v1652 = vadd.f32 %v1573, %v1651
        %1653 = vdwg.mxu0
        %1654 = vmatpush.bf16.msra.mxu0 %v1003
        %1655 = vmatpush.bf16.msra.mxu0 %v1000
        %1656 = vmatpush.bf16.msra.mxu0 %v997
        %1657 = vmatpush.bf16.msra.mxu0 %v994
        %1658 = vmatpush.bf16.msra.mxu0 %v991
        %1659 = vmatpush.bf16.msra.mxu0 %v988
        %1660 = vmatpush.bf16.msra.mxu0 %v985
        %1661 = vmatpush.bf16.msra.mxu0 %v982
        %1662 = vmatmul.bf16.gmra.mxu0 %v395
        %v1663 = vpop.f32.mrf.mxu0
        %v1664 = vadd.f32 %v1585, %v1663
        %v1665 = vpop.f32.mrf.mxu0
        %v1666 = vadd.f32 %v1587, %v1665
        %1667 = vmatmul.bf16.gmra.mxu0 %v396
        %v1668 = vpop.f32.mrf.mxu0
        %v1669 = vadd.f32 %v1590, %v1668
        %v1670 = vpop.f32.mrf.mxu0
        %v1671 = vadd.f32 %v1592, %v1670
        %1672 = vmatmul.bf16.gmra.mxu0 %v397
        %v1673 = vpop.f32.mrf.mxu0
        %v1674 = vadd.f32 %v1595, %v1673
        %v1675 = vpop.f32.mrf.mxu0
        %v1676 = vadd.f32 %v1597, %v1675
        %1677 = vmatmul.bf16.gmra.mxu0 %v398
        %v1678 = vpop.f32.mrf.mxu0
        %v1679 = vadd.f32 %v1600, %v1678
        %v1680 = vpop.f32.mrf.mxu0
        %v1681 = vadd.f32 %v1602, %v1680
        %1682 = vmatmul.bf16.gmra.mxu0 %v399
        %v1683 = vpop.f32.mrf.mxu0
        %v1684 = vadd.f32 %v1605, %v1683
        %v1685 = vpop.f32.mrf.mxu0
        %v1686 = vadd.f32 %v1607, %v1685
        %1687 = vmatmul.bf16.gmra.mxu0 %v400
        %v1688 = vpop.f32.mrf.mxu0
        %v1689 = vadd.f32 %v1610, %v1688
        %v1690 = vpop.f32.mrf.mxu0
        %v1691 = vadd.f32 %v1612, %v1690
        %1692 = vmatmul.bf16.gmra.mxu0 %v401
        %v1693 = vpop.f32.mrf.mxu0
        %v1694 = vadd.f32 %v1615, %v1693
        %v1695 = vpop.f32.mrf.mxu0
        %v1696 = vadd.f32 %v1617, %v1695
        %1697 = vmatmul.bf16.gmra.mxu0 %v402
        %v1698 = vpop.f32.mrf.mxu0
        %v1699 = vadd.f32 %v1620, %v1698
        %v1700 = vpop.f32.mrf.mxu0
        %v1701 = vadd.f32 %v1622, %v1700
        %1702 = vmatmul.bf16.gmra.mxu0 %v425
        %v1703 = vpop.f32.mrf.mxu0
        %v1704 = vadd.f32 %v1625, %v1703
        %v1705 = vpop.f32.mrf.mxu0
        %v1706 = vadd.f32 %v1627, %v1705
        %1707 = vmatmul.bf16.gmra.mxu0 %v426
        %v1708 = vpop.f32.mrf.mxu0
        %v1709 = vadd.f32 %v1630, %v1708
        %v1710 = vpop.f32.mrf.mxu0
        %v1711 = vadd.f32 %v1632, %v1710
        %1712 = vmatmul.bf16.gmra.mxu0 %v437
        %v1713 = vpop.f32.mrf.mxu0
        %v1714 = vadd.f32 %v1635, %v1713
        %v1715 = vpop.f32.mrf.mxu0
        %v1716 = vadd.f32 %v1637, %v1715
        %1717 = vmatmul.bf16.gmra.mxu0 %v438
        %v1718 = vpop.f32.mrf.mxu0
        %v1719 = vadd.f32 %v1640, %v1718
        %v1720 = vpop.f32.mrf.mxu0
        %v1721 = vadd.f32 %v1642, %v1720
        %1722 = vmatmul.bf16.gmra.mxu0 %v449
        %v1723 = vpop.f32.mrf.mxu0
        %v1724 = vadd.f32 %v1645, %v1723
        %v1725 = vpop.f32.mrf.mxu0
        %v1726 = vadd.f32 %v1647, %v1725
        %1727 = vmatmul.bf16.gmra.mxu0 %v450
        %v1728 = vpop.f32.mrf.mxu0
        %v1729 = vadd.f32 %v1650, %v1728
        %v1730 = vpop.f32.mrf.mxu0
        %v1731 = vadd.f32 %v1652, %v1730
        %1732 = vdwg.mxu0
        %1733 = vmatpush.bf16.msra.mxu0 %v932
        %1734 = vmatpush.bf16.msra.mxu0 %v929
        %1735 = vmatpush.bf16.msra.mxu0 %v926
        %1736 = vmatpush.bf16.msra.mxu0 %v923
        %1737 = vmatpush.bf16.msra.mxu0 %v920
        %1738 = vmatpush.bf16.msra.mxu0 %v917
        %1739 = vmatpush.bf16.msra.mxu0 %v914
        %1740 = vmatpush.bf16.msra.mxu0 %v911
        %1741 = vmatmul.bf16.gmra.mxu0 %v389
        %v1742 = vpop.f32.mrf.mxu0
        %v1743 = vadd.f32 %v585, %v1742
        %v1744 = vpop.f32.mrf.mxu0
        %v1745 = vadd.f32 %v585, %v1744
        %1746 = vmatmul.bf16.gmra.mxu0 %v390
        %v1747 = vpop.f32.mrf.mxu0
        %v1748 = vadd.f32 %v585, %v1747
        %v1749 = vpop.f32.mrf.mxu0
        %v1750 = vadd.f32 %v585, %v1749
        %1751 = vmatmul.bf16.gmra.mxu0 %v391
        %v1752 = vpop.f32.mrf.mxu0
        %v1753 = vadd.f32 %v585, %v1752
        %v1754 = vpop.f32.mrf.mxu0
        %v1755 = vadd.f32 %v585, %v1754
        %1756 = vmatmul.bf16.gmra.mxu0 %v392
        %v1757 = vpop.f32.mrf.mxu0
        %v1758 = vadd.f32 %v585, %v1757
        %v1759 = vpop.f32.mrf.mxu0
        %v1760 = vadd.f32 %v585, %v1759
        %1761 = vmatmul.bf16.gmra.mxu0 %v393
        %v1762 = vpop.f32.mrf.mxu0
        %v1763 = vadd.f32 %v585, %v1762
        %v1764 = vpop.f32.mrf.mxu0
        %v1765 = vadd.f32 %v585, %v1764
        %1766 = vmatmul.bf16.gmra.mxu0 %v394
        %v1767 = vpop.f32.mrf.mxu0
        %v1768 = vadd.f32 %v585, %v1767
        %v1769 = vpop.f32.mrf.mxu0
        %v1770 = vadd.f32 %v585, %v1769
        %1771 = vmatmul.bf16.gmra.mxu0 %v395
        %v1772 = vpop.f32.mrf.mxu0
        %v1773 = vadd.f32 %v585, %v1772
        %v1774 = vpop.f32.mrf.mxu0
        %v1775 = vadd.f32 %v585, %v1774
        %1776 = vmatmul.bf16.gmra.mxu0 %v396
        %v1777 = vpop.f32.mrf.mxu0
        %v1778 = vadd.f32 %v585, %v1777
        %v1779 = vpop.f32.mrf.mxu0
        %v1780 = vadd.f32 %v585, %v1779
        %1781 = vmatmul.bf16.gmra.mxu0 %v397
        %v1782 = vpop.f32.mrf.mxu0
        %v1783 = vadd.f32 %v585, %v1782
        %v1784 = vpop.f32.mrf.mxu0
        %v1785 = vadd.f32 %v585, %v1784
        %1786 = vmatmul.bf16.gmra.mxu0 %v398
        %v1787 = vpop.f32.mrf.mxu0
        %v1788 = vadd.f32 %v585, %v1787
        %v1789 = vpop.f32.mrf.mxu0
        %v1790 = vadd.f32 %v585, %v1789
        %1791 = vmatmul.bf16.gmra.mxu0 %v399
        %v1792 = vpop.f32.mrf.mxu0
        %v1793 = vadd.f32 %v585, %v1792
        %v1794 = vpop.f32.mrf.mxu0
        %v1795 = vadd.f32 %v585, %v1794
        %1796 = vmatmul.bf16.gmra.mxu0 %v400
        %v1797 = vpop.f32.mrf.mxu0
        %v1798 = vadd.f32 %v585, %v1797
        %v1799 = vpop.f32.mrf.mxu0
        %v1800 = vadd.f32 %v585, %v1799
        %1801 = vmatmul.bf16.gmra.mxu0 %v401
        %v1802 = vpop.f32.mrf.mxu0
        %v1803 = vadd.f32 %v585, %v1802
        %v1804 = vpop.f32.mrf.mxu0
        %v1805 = vadd.f32 %v585, %v1804
        %1806 = vmatmul.bf16.gmra.mxu0 %v402
        %v1807 = vpop.f32.mrf.mxu0
        %v1808 = vadd.f32 %v585, %v1807
        %v1809 = vpop.f32.mrf.mxu0
        %v1810 = vadd.f32 %v585, %v1809
        %1811 = vdwg.mxu0
        %1812 = vmatpush.bf16.msra.mxu0 %v956
        %1813 = vmatpush.bf16.msra.mxu0 %v953
        %1814 = vmatpush.bf16.msra.mxu0 %v950
        %1815 = vmatpush.bf16.msra.mxu0 %v947
        %1816 = vmatpush.bf16.msra.mxu0 %v944
        %1817 = vmatpush.bf16.msra.mxu0 %v941
        %1818 = vmatpush.bf16.msra.mxu0 %v938
        %1819 = vmatpush.bf16.msra.mxu0 %v935
        %1820 = vmatmul.bf16.gmra.mxu0 %v391
        %v1821 = vpop.f32.mrf.mxu0
        %v1822 = vadd.f32 %v1743, %v1821
        %v1823 = vpop.f32.mrf.mxu0
        %v1824 = vadd.f32 %v1745, %v1823
        %1825 = vmatmul.bf16.gmra.mxu0 %v392
        %v1826 = vpop.f32.mrf.mxu0
        %v1827 = vadd.f32 %v1748, %v1826
        %v1828 = vpop.f32.mrf.mxu0
        %v1829 = vadd.f32 %v1750, %v1828
        %1830 = vmatmul.bf16.gmra.mxu0 %v393
        %v1831 = vpop.f32.mrf.mxu0
        %v1832 = vadd.f32 %v1753, %v1831
        %v1833 = vpop.f32.mrf.mxu0
        %v1834 = vadd.f32 %v1755, %v1833
        %1835 = vmatmul.bf16.gmra.mxu0 %v394
        %v1836 = vpop.f32.mrf.mxu0
        %v1837 = vadd.f32 %v1758, %v1836
        %v1838 = vpop.f32.mrf.mxu0
        %v1839 = vadd.f32 %v1760, %v1838
        %1840 = vmatmul.bf16.gmra.mxu0 %v395
        %v1841 = vpop.f32.mrf.mxu0
        %v1842 = vadd.f32 %v1763, %v1841
        %v1843 = vpop.f32.mrf.mxu0
        %v1844 = vadd.f32 %v1765, %v1843
        %1845 = vmatmul.bf16.gmra.mxu0 %v396
        %v1846 = vpop.f32.mrf.mxu0
        %v1847 = vadd.f32 %v1768, %v1846
        %v1848 = vpop.f32.mrf.mxu0
        %v1849 = vadd.f32 %v1770, %v1848
        %1850 = vmatmul.bf16.gmra.mxu0 %v397
        %v1851 = vpop.f32.mrf.mxu0
        %v1852 = vadd.f32 %v1773, %v1851
        %v1853 = vpop.f32.mrf.mxu0
        %v1854 = vadd.f32 %v1775, %v1853
        %1855 = vmatmul.bf16.gmra.mxu0 %v398
        %v1856 = vpop.f32.mrf.mxu0
        %v1857 = vadd.f32 %v1778, %v1856
        %v1858 = vpop.f32.mrf.mxu0
        %v1859 = vadd.f32 %v1780, %v1858
        %1860 = vmatmul.bf16.gmra.mxu0 %v399
        %v1861 = vpop.f32.mrf.mxu0
        %v1862 = vadd.f32 %v1783, %v1861
        %v1863 = vpop.f32.mrf.mxu0
        %v1864 = vadd.f32 %v1785, %v1863
        %1865 = vmatmul.bf16.gmra.mxu0 %v400
        %v1866 = vpop.f32.mrf.mxu0
        %v1867 = vadd.f32 %v1788, %v1866
        %v1868 = vpop.f32.mrf.mxu0
        %v1869 = vadd.f32 %v1790, %v1868
        %1870 = vmatmul.bf16.gmra.mxu0 %v401
        %v1871 = vpop.f32.mrf.mxu0
        %v1872 = vadd.f32 %v1793, %v1871
        %v1873 = vpop.f32.mrf.mxu0
        %v1874 = vadd.f32 %v1795, %v1873
        %1875 = vmatmul.bf16.gmra.mxu0 %v402
        %v1876 = vpop.f32.mrf.mxu0
        %v1877 = vadd.f32 %v1798, %v1876
        %v1878 = vpop.f32.mrf.mxu0
        %v1879 = vadd.f32 %v1800, %v1878
        %1880 = vmatmul.bf16.gmra.mxu0 %v425
        %v1881 = vpop.f32.mrf.mxu0
        %v1882 = vadd.f32 %v1803, %v1881
        %v1883 = vpop.f32.mrf.mxu0
        %v1884 = vadd.f32 %v1805, %v1883
        %1885 = vmatmul.bf16.gmra.mxu0 %v426
        %v1886 = vpop.f32.mrf.mxu0
        %v1887 = vadd.f32 %v1808, %v1886
        %v1888 = vpop.f32.mrf.mxu0
        %v1889 = vadd.f32 %v1810, %v1888
        %1890 = vdwg.mxu0
        %1891 = vmatpush.bf16.msra.mxu0 %v980
        %1892 = vmatpush.bf16.msra.mxu0 %v977
        %1893 = vmatpush.bf16.msra.mxu0 %v974
        %1894 = vmatpush.bf16.msra.mxu0 %v971
        %1895 = vmatpush.bf16.msra.mxu0 %v968
        %1896 = vmatpush.bf16.msra.mxu0 %v965
        %1897 = vmatpush.bf16.msra.mxu0 %v962
        %1898 = vmatpush.bf16.msra.mxu0 %v959
        %1899 = vmatmul.bf16.gmra.mxu0 %v393
        %v1900 = vpop.f32.mrf.mxu0
        %v1901 = vadd.f32 %v1822, %v1900
        %v1902 = vpop.f32.mrf.mxu0
        %v1903 = vadd.f32 %v1824, %v1902
        %1904 = vmatmul.bf16.gmra.mxu0 %v394
        %v1905 = vpop.f32.mrf.mxu0
        %v1906 = vadd.f32 %v1827, %v1905
        %v1907 = vpop.f32.mrf.mxu0
        %v1908 = vadd.f32 %v1829, %v1907
        %1909 = vmatmul.bf16.gmra.mxu0 %v395
        %v1910 = vpop.f32.mrf.mxu0
        %v1911 = vadd.f32 %v1832, %v1910
        %v1912 = vpop.f32.mrf.mxu0
        %v1913 = vadd.f32 %v1834, %v1912
        %1914 = vmatmul.bf16.gmra.mxu0 %v396
        %v1915 = vpop.f32.mrf.mxu0
        %v1916 = vadd.f32 %v1837, %v1915
        %v1917 = vpop.f32.mrf.mxu0
        %v1918 = vadd.f32 %v1839, %v1917
        %1919 = vmatmul.bf16.gmra.mxu0 %v397
        %v1920 = vpop.f32.mrf.mxu0
        %v1921 = vadd.f32 %v1842, %v1920
        %v1922 = vpop.f32.mrf.mxu0
        %v1923 = vadd.f32 %v1844, %v1922
        %1924 = vmatmul.bf16.gmra.mxu0 %v398
        %v1925 = vpop.f32.mrf.mxu0
        %v1926 = vadd.f32 %v1847, %v1925
        %v1927 = vpop.f32.mrf.mxu0
        %v1928 = vadd.f32 %v1849, %v1927
        %1929 = vmatmul.bf16.gmra.mxu0 %v399
        %v1930 = vpop.f32.mrf.mxu0
        %v1931 = vadd.f32 %v1852, %v1930
        %v1932 = vpop.f32.mrf.mxu0
        %v1933 = vadd.f32 %v1854, %v1932
        %1934 = vmatmul.bf16.gmra.mxu0 %v400
        %v1935 = vpop.f32.mrf.mxu0
        %v1936 = vadd.f32 %v1857, %v1935
        %v1937 = vpop.f32.mrf.mxu0
        %v1938 = vadd.f32 %v1859, %v1937
        %1939 = vmatmul.bf16.gmra.mxu0 %v401
        %v1940 = vpop.f32.mrf.mxu0
        %v1941 = vadd.f32 %v1862, %v1940
        %v1942 = vpop.f32.mrf.mxu0
        %v1943 = vadd.f32 %v1864, %v1942
        %1944 = vmatmul.bf16.gmra.mxu0 %v402
        %v1945 = vpop.f32.mrf.mxu0
        %v1946 = vadd.f32 %v1867, %v1945
        %v1947 = vpop.f32.mrf.mxu0
        %v1948 = vadd.f32 %v1869, %v1947
        %1949 = vmatmul.bf16.gmra.mxu0 %v425
        %v1950 = vpop.f32.mrf.mxu0
        %v1951 = vadd.f32 %v1872, %v1950
        %v1952 = vpop.f32.mrf.mxu0
        %v1953 = vadd.f32 %v1874, %v1952
        %1954 = vmatmul.bf16.gmra.mxu0 %v426
        %v1955 = vpop.f32.mrf.mxu0
        %v1956 = vadd.f32 %v1877, %v1955
        %v1957 = vpop.f32.mrf.mxu0
        %v1958 = vadd.f32 %v1879, %v1957
        %1959 = vmatmul.bf16.gmra.mxu0 %v437
        %v1960 = vpop.f32.mrf.mxu0
        %v1961 = vadd.f32 %v1882, %v1960
        %v1962 = vpop.f32.mrf.mxu0
        %v1963 = vadd.f32 %v1884, %v1962
        %1964 = vmatmul.bf16.gmra.mxu0 %v438
        %v1965 = vpop.f32.mrf.mxu0
        %v1966 = vadd.f32 %v1887, %v1965
        %v1967 = vpop.f32.mrf.mxu0
        %v1968 = vadd.f32 %v1889, %v1967
        %1969 = vdwg.mxu0
        %1970 = vmatpush.bf16.msra.mxu0 %v1004
        %1971 = vmatpush.bf16.msra.mxu0 %v1001
        %1972 = vmatpush.bf16.msra.mxu0 %v998
        %1973 = vmatpush.bf16.msra.mxu0 %v995
        %1974 = vmatpush.bf16.msra.mxu0 %v992
        %1975 = vmatpush.bf16.msra.mxu0 %v989
        %1976 = vmatpush.bf16.msra.mxu0 %v986
        %1977 = vmatpush.bf16.msra.mxu0 %v983
        %1978 = vmatmul.bf16.gmra.mxu0 %v395
        %v1979 = vpop.f32.mrf.mxu0
        %v1980 = vadd.f32 %v1901, %v1979
        %v1981 = vpop.f32.mrf.mxu0
        %v1982 = vadd.f32 %v1903, %v1981
        %1983 = vmatmul.bf16.gmra.mxu0 %v396
        %v1984 = vpop.f32.mrf.mxu0
        %v1985 = vadd.f32 %v1906, %v1984
        %v1986 = vpop.f32.mrf.mxu0
        %v1987 = vadd.f32 %v1908, %v1986
        %1988 = vmatmul.bf16.gmra.mxu0 %v397
        %v1989 = vpop.f32.mrf.mxu0
        %v1990 = vadd.f32 %v1911, %v1989
        %v1991 = vpop.f32.mrf.mxu0
        %v1992 = vadd.f32 %v1913, %v1991
        %1993 = vmatmul.bf16.gmra.mxu0 %v398
        %v1994 = vpop.f32.mrf.mxu0
        %v1995 = vadd.f32 %v1916, %v1994
        %v1996 = vpop.f32.mrf.mxu0
        %v1997 = vadd.f32 %v1918, %v1996
        %1998 = vmatmul.bf16.gmra.mxu0 %v399
        %v1999 = vpop.f32.mrf.mxu0
        %v2000 = vadd.f32 %v1921, %v1999
        %v2001 = vpop.f32.mrf.mxu0
        %v2002 = vadd.f32 %v1923, %v2001
        %2003 = vmatmul.bf16.gmra.mxu0 %v400
        %v2004 = vpop.f32.mrf.mxu0
        %v2005 = vadd.f32 %v1926, %v2004
        %v2006 = vpop.f32.mrf.mxu0
        %v2007 = vadd.f32 %v1928, %v2006
        %2008 = vmatmul.bf16.gmra.mxu0 %v401
        %v2009 = vpop.f32.mrf.mxu0
        %v2010 = vadd.f32 %v1931, %v2009
        %v2011 = vpop.f32.mrf.mxu0
        %v2012 = vadd.f32 %v1933, %v2011
        %2013 = vmatmul.bf16.gmra.mxu0 %v402
        %v2014 = vpop.f32.mrf.mxu0
        %v2015 = vadd.f32 %v1936, %v2014
        %v2016 = vpop.f32.mrf.mxu0
        %v2017 = vadd.f32 %v1938, %v2016
        %2018 = vmatmul.bf16.gmra.mxu0 %v425
        %v2019 = vpop.f32.mrf.mxu0
        %v2020 = vadd.f32 %v1941, %v2019
        %v2021 = vpop.f32.mrf.mxu0
        %v2022 = vadd.f32 %v1943, %v2021
        %2023 = vmatmul.bf16.gmra.mxu0 %v426
        %v2024 = vpop.f32.mrf.mxu0
        %v2025 = vadd.f32 %v1946, %v2024
        %v2026 = vpop.f32.mrf.mxu0
        %v2027 = vadd.f32 %v1948, %v2026
        %2028 = vmatmul.bf16.gmra.mxu0 %v437
        %v2029 = vpop.f32.mrf.mxu0
        %v2030 = vadd.f32 %v1951, %v2029
        %v2031 = vpop.f32.mrf.mxu0
        %v2032 = vadd.f32 %v1953, %v2031
        %2033 = vmatmul.bf16.gmra.mxu0 %v438
        %v2034 = vpop.f32.mrf.mxu0
        %v2035 = vadd.f32 %v1956, %v2034
        %v2036 = vpop.f32.mrf.mxu0
        %v2037 = vadd.f32 %v1958, %v2036
        %2038 = vmatmul.bf16.gmra.mxu0 %v449
        %v2039 = vpop.f32.mrf.mxu0
        %v2040 = vadd.f32 %v1961, %v2039
        %v2041 = vpop.f32.mrf.mxu0
        %v2042 = vadd.f32 %v1963, %v2041
        %2043 = vmatmul.bf16.gmra.mxu0 %v450
        %v2044 = vpop.f32.mrf.mxu0
        %v2045 = vadd.f32 %v1966, %v2044
        %v2046 = vpop.f32.mrf.mxu0
        %v2047 = vadd.f32 %v1968, %v2046
        %2048 = vdwg.mxu0
        %v2049 = vmax.f32 %v1348, 0.0
        %v2050 = vmax.f32 %v1664, 0.0
        %v2051 = vmax.f32 %v1980, 0.0
        %v2052 = vmax.f32 %v1350, 0.0
        %v2053 = vmax.f32 %v1666, 0.0
        %v2054 = vmax.f32 %v1982, 0.0
        %v2055 = vmax.f32 %v1353, 0.0
        %v2056 = vmax.f32 %v1669, 0.0
        %v2057 = vmax.f32 %v1985, 0.0
        %v2058 = vmax.f32 %v1355, 0.0
        %v2059 = vmax.f32 %v1671, 0.0
        %v2060 = vmax.f32 %v1987, 0.0
        %v2061 = vmax.f32 %v1358, 0.0
        %v2062 = vmax.f32 %v1674, 0.0
        %v2063 = vmax.f32 %v1990, 0.0
        %v2064 = vmax.f32 %v1360, 0.0
        %v2065 = vmax.f32 %v1676, 0.0
        %v2066 = vmax.f32 %v1992, 0.0
        %v2067 = vmax.f32 %v1363, 0.0
        %v2068 = vmax.f32 %v1679, 0.0
        %v2069 = vmax.f32 %v1995, 0.0
        %v2070 = vmax.f32 %v1365, 0.0
        %v2071 = vmax.f32 %v1681, 0.0
        %v2072 = vmax.f32 %v1997, 0.0
        %v2073 = vmax.f32 %v1368, 0.0
        %v2074 = vmax.f32 %v1684, 0.0
        %v2075 = vmax.f32 %v2000, 0.0
        %v2076 = vmax.f32 %v1370, 0.0
        %v2077 = vmax.f32 %v1686, 0.0
        %v2078 = vmax.f32 %v2002, 0.0
        %v2079 = vmax.f32 %v1373, 0.0
        %v2080 = vmax.f32 %v1689, 0.0
        %v2081 = vmax.f32 %v2005, 0.0
        %v2082 = vmax.f32 %v1375, 0.0
        %v2083 = vmax.f32 %v1691, 0.0
        %v2084 = vmax.f32 %v2007, 0.0
        %v2085 = vmax.f32 %v1378, 0.0
        %v2086 = vmax.f32 %v1694, 0.0
        %v2087 = vmax.f32 %v2010, 0.0
        %v2088 = vmax.f32 %v1380, 0.0
        %v2089 = vmax.f32 %v1696, 0.0
        %v2090 = vmax.f32 %v2012, 0.0
        %v2091 = vmax.f32 %v1383, 0.0
        %v2092 = vmax.f32 %v1699, 0.0
        %v2093 = vmax.f32 %v2015, 0.0
        %v2094 = vmax.f32 %v1385, 0.0
        %v2095 = vmax.f32 %v1701, 0.0
        %v2096 = vmax.f32 %v2017, 0.0
        %v2097 = vmax.f32 %v1388, 0.0
        %v2098 = vmax.f32 %v1704, 0.0
        %v2099 = vmax.f32 %v2020, 0.0
        %v2100 = vmax.f32 %v1390, 0.0
        %v2101 = vmax.f32 %v1706, 0.0
        %v2102 = vmax.f32 %v2022, 0.0
        %v2103 = vmax.f32 %v1393, 0.0
        %v2104 = vmax.f32 %v1709, 0.0
        %v2105 = vmax.f32 %v2025, 0.0
        %v2106 = vmax.f32 %v1395, 0.0
        %v2107 = vmax.f32 %v1711, 0.0
        %v2108 = vmax.f32 %v2027, 0.0
        %v2109 = vmax.f32 %v1398, 0.0
        %v2110 = vmax.f32 %v1714, 0.0
        %v2111 = vmax.f32 %v2030, 0.0
        %v2112 = vmax.f32 %v1400, 0.0
        %v2113 = vmax.f32 %v1716, 0.0
        %v2114 = vmax.f32 %v2032, 0.0
        %v2115 = vmax.f32 %v1403, 0.0
        %v2116 = vmax.f32 %v1719, 0.0
        %v2117 = vmax.f32 %v2035, 0.0
        %v2118 = vmax.f32 %v1405, 0.0
        %v2119 = vmax.f32 %v1721, 0.0
        %v2120 = vmax.f32 %v2037, 0.0
        %v2121 = vmax.f32 %v1408, 0.0
        %v2122 = vmax.f32 %v1724, 0.0
        %v2123 = vmax.f32 %v2040, 0.0
        %v2124 = vmax.f32 %v1410, 0.0
        %v2125 = vmax.f32 %v1726, 0.0
        %v2126 = vmax.f32 %v2042, 0.0
        %v2127 = vmax.f32 %v1413, 0.0
        %v2128 = vmax.f32 %v1729, 0.0
        %v2129 = vmax.f32 %v2045, 0.0
        %v2130 = vmax.f32 %v1415, 0.0
        %v2131 = vmax.f32 %v1731, 0.0
        %v2132 = vmax.f32 %v2047, 0.0
        %v2133 = vld [vmem:[#allocation8] sm:$0x7]
        %v2134 = vld [vmem:[#allocation8 + $0x3] sm:$0x7]
        %v2135 = vld [vmem:[#allocation8 + $0x6] sm:$0x7]
        %v2136 = vld [vmem:[#allocation8 + $0x9] sm:$0x7]
        %v2137 = vld [vmem:[#allocation8 + $0xc] sm:$0x7]
        %v2138 = vld [vmem:[#allocation8 + $0xf] sm:$0x7]
        %v2139 = vld [vmem:[#allocation8 + $0x12] sm:$0x7]
        %v2147 = vperm.slane %v2133, 0
        %v2148 = vperm.slane %v2133, 1
        %v2149 = vperm.slane %v2133, 2
        %v2150 = vperm.slane %v2134, 0
        %v2151 = vperm.slane %v2134, 1
        %v2152 = vperm.slane %v2134, 2
        %v2153 = vperm.slane %v2135, 0
        %v2154 = vperm.slane %v2135, 1
        %v2155 = vperm.slane %v2135, 2
        %v2156 = vperm.slane %v2136, 0
        %v2157 = vperm.slane %v2136, 1
        %v2158 = vperm.slane %v2136, 2
        %v2159 = vperm.slane %v2137, 0
        %v2160 = vperm.slane %v2137, 1
        %v2161 = vperm.slane %v2137, 2
        %v2162 = vperm.slane %v2138, 0
        %v2163 = vperm.slane %v2138, 1
        %v2164 = vperm.slane %v2138, 2
        %v2165 = vperm.slane %v2139, 0
        %v2166 = vperm.slane %v2139, 1
        %v2167 = vperm.slane %v2139, 2
        %v2189 = vmul.f32 %v2049, %v2147
        %v2190 = vmul.f32 %v2050, %v2148
        %v2191 = vmul.f32 %v2051, %v2149
        %v2192 = vmul.f32 %v2052, %v2147
        %v2193 = vmul.f32 %v2053, %v2148
        %v2194 = vmul.f32 %v2054, %v2149
        %v2195 = vmul.f32 %v2055, %v2147
        %v2196 = vmul.f32 %v2056, %v2148
        %v2197 = vmul.f32 %v2057, %v2149
        %v2198 = vmul.f32 %v2058, %v2147
        %v2199 = vmul.f32 %v2059, %v2148
        %v2200 = vmul.f32 %v2060, %v2149
        %v2201 = vmul.f32 %v2061, %v2150
        %v2202 = vmul.f32 %v2062, %v2151
        %v2203 = vmul.f32 %v2063, %v2152
        %v2204 = vmul.f32 %v2064, %v2150
        %v2205 = vmul.f32 %v2065, %v2151
        %v2206 = vmul.f32 %v2066, %v2152
        %v2207 = vmul.f32 %v2067, %v2150
        %v2208 = vmul.f32 %v2068, %v2151
        %v2209 = vmul.f32 %v2069, %v2152
        %v2210 = vmul.f32 %v2070, %v2150
        %v2211 = vmul.f32 %v2071, %v2151
        %v2212 = vmul.f32 %v2072, %v2152
        %v2213 = vmul.f32 %v2073, %v2153
        %v2214 = vmul.f32 %v2074, %v2154
        %v2215 = vmul.f32 %v2075, %v2155
        %v2216 = vmul.f32 %v2076, %v2153
        %v2217 = vmul.f32 %v2077, %v2154
        %v2218 = vmul.f32 %v2078, %v2155
        %v2219 = vmul.f32 %v2079, %v2153
        %v2220 = vmul.f32 %v2080, %v2154
        %v2221 = vmul.f32 %v2081, %v2155
        %v2222 = vmul.f32 %v2082, %v2153
        %v2223 = vmul.f32 %v2083, %v2154
        %v2224 = vmul.f32 %v2084, %v2155
        %v2225 = vmul.f32 %v2085, %v2156
        %v2226 = vmul.f32 %v2086, %v2157
        %v2227 = vmul.f32 %v2087, %v2158
        %v2228 = vmul.f32 %v2088, %v2156
        %v2229 = vmul.f32 %v2089, %v2157
        %v2230 = vmul.f32 %v2090, %v2158
        %v2231 = vmul.f32 %v2091, %v2156
        %v2232 = vmul.f32 %v2092, %v2157
        %v2233 = vmul.f32 %v2093, %v2158
        %v2234 = vmul.f32 %v2094, %v2156
        %v2235 = vmul.f32 %v2095, %v2157
        %v2236 = vmul.f32 %v2096, %v2158
        %v2237 = vmul.f32 %v2097, %v2159
        %v2238 = vmul.f32 %v2098, %v2160
        %v2239 = vmul.f32 %v2099, %v2161
        %v2240 = vmul.f32 %v2100, %v2159
        %v2241 = vmul.f32 %v2101, %v2160
        %v2242 = vmul.f32 %v2102, %v2161
        %v2243 = vmul.f32 %v2103, %v2159
        %v2244 = vmul.f32 %v2104, %v2160
        %v2245 = vmul.f32 %v2105, %v2161
        %v2246 = vmul.f32 %v2106, %v2159
        %v2247 = vmul.f32 %v2107, %v2160
        %v2248 = vmul.f32 %v2108, %v2161
        %v2249 = vmul.f32 %v2109, %v2162
        %v2250 = vmul.f32 %v2110, %v2163
        %v2251 = vmul.f32 %v2111, %v2164
        %v2252 = vmul.f32 %v2112, %v2162
        %v2253 = vmul.f32 %v2113, %v2163
        %v2254 = vmul.f32 %v2114, %v2164
        %v2255 = vmul.f32 %v2115, %v2162
        %v2256 = vmul.f32 %v2116, %v2163
        %v2257 = vmul.f32 %v2117, %v2164
        %v2258 = vmul.f32 %v2118, %v2162
        %v2259 = vmul.f32 %v2119, %v2163
        %v2260 = vmul.f32 %v2120, %v2164
        %v2261 = vmul.f32 %v2121, %v2165
        %v2262 = vmul.f32 %v2122, %v2166
        %v2263 = vmul.f32 %v2123, %v2167
        %v2264 = vmul.f32 %v2124, %v2165
        %v2265 = vmul.f32 %v2125, %v2166
        %v2266 = vmul.f32 %v2126, %v2167
        %v2267 = vmul.f32 %v2127, %v2165
        %v2268 = vmul.f32 %v2128, %v2166
        %v2269 = vmul.f32 %v2129, %v2167
        %v2270 = vmul.f32 %v2130, %v2165
        %v2271 = vmul.f32 %v2131, %v2166
        %v2272 = vmul.f32 %v2132, %v2167
        %v2273 = vmax.f32 %v2189, %v2201
        %v2274 = vmax.f32 %v2273, %v2213
        %v2275 = vmax.f32 %v2274, %v2225
        %v2276 = vmax.f32 %v2275, %v2237
        %v2277 = vmax.f32 %v2276, %v2249
        %v2278 = vmax.f32 %v2277, %v2261
        %v2279 = vmax.f32 %v2190, %v2202
        %v2280 = vmax.f32 %v2279, %v2214
        %v2281 = vmax.f32 %v2280, %v2226
        %v2282 = vmax.f32 %v2281, %v2238
        %v2283 = vmax.f32 %v2282, %v2250
        %v2284 = vmax.f32 %v2283, %v2262
        %v2285 = vmax.f32 %v2191, %v2203
        %v2286 = vmax.f32 %v2285, %v2215
        %v2287 = vmax.f32 %v2286, %v2227
        %v2288 = vmax.f32 %v2287, %v2239
        %v2289 = vmax.f32 %v2288, %v2251
        %v2290 = vmax.f32 %v2289, %v2263
        %v2291 = vmax.f32 %v2192, %v2204
        %v2292 = vmax.f32 %v2291, %v2216
        %v2293 = vmax.f32 %v2292, %v2228
        %v2294 = vmax.f32 %v2293, %v2240
        %v2295 = vmax.f32 %v2294, %v2252
        %v2296 = vmax.f32 %v2295, %v2264
        %v2297 = vmax.f32 %v2193, %v2205
        %v2298 = vmax.f32 %v2297, %v2217
        %v2299 = vmax.f32 %v2298, %v2229
        %v2300 = vmax.f32 %v2299, %v2241
        %v2301 = vmax.f32 %v2300, %v2253
        %v2302 = vmax.f32 %v2301, %v2265
        %v2303 = vmax.f32 %v2194, %v2206
        %v2304 = vmax.f32 %v2303, %v2218
        %v2305 = vmax.f32 %v2304, %v2230
        %v2306 = vmax.f32 %v2305, %v2242
        %v2307 = vmax.f32 %v2306, %v2254
        %v2308 = vmax.f32 %v2307, %v2266
        %v2309 = vmax.f32 %v2195, %v2207
        %v2310 = vmax.f32 %v2309, %v2219
        %v2311 = vmax.f32 %v2310, %v2231
        %v2312 = vmax.f32 %v2311, %v2243
        %v2313 = vmax.f32 %v2312, %v2255
        %v2314 = vmax.f32 %v2313, %v2267
        %v2315 = vmax.f32 %v2196, %v2208
        %v2316 = vmax.f32 %v2315, %v2220
        %v2317 = vmax.f32 %v2316, %v2232
        %v2318 = vmax.f32 %v2317, %v2244
        %v2319 = vmax.f32 %v2318, %v2256
        %v2320 = vmax.f32 %v2319, %v2268
        %v2321 = vmax.f32 %v2197, %v2209
        %v2322 = vmax.f32 %v2321, %v2221
        %v2323 = vmax.f32 %v2322, %v2233
        %v2324 = vmax.f32 %v2323, %v2245
        %v2325 = vmax.f32 %v2324, %v2257
        %v2326 = vmax.f32 %v2325, %v2269
        %v2327 = vmax.f32 %v2198, %v2210
        %v2328 = vmax.f32 %v2327, %v2222
        %v2329 = vmax.f32 %v2328, %v2234
        %v2330 = vmax.f32 %v2329, %v2246
        %v2331 = vmax.f32 %v2330, %v2258
        %v2332 = vmax.f32 %v2331, %v2270
        %v2333 = vmax.f32 %v2199, %v2211
        %v2334 = vmax.f32 %v2333, %v2223
        %v2335 = vmax.f32 %v2334, %v2235
        %v2336 = vmax.f32 %v2335, %v2247
        %v2337 = vmax.f32 %v2336, %v2259
        %v2338 = vmax.f32 %v2337, %v2271
        %v2339 = vmax.f32 %v2200, %v2212
        %v2340 = vmax.f32 %v2339, %v2224
        %v2341 = vmax.f32 %v2340, %v2236
        %v2342 = vmax.f32 %v2341, %v2248
        %v2343 = vmax.f32 %v2342, %v2260
        %v2344 = vmax.f32 %v2343, %v2272
        %v2345 = vpack.c.bf16 %v2284, %v2278
        %v2346 = vpack.c.bf16 %v2290, %v2290
        %v2347 = vpack.c.bf16 %v2302, %v2296
        %v2348 = vpack.c.bf16 %v2308, %v2308
        %v2349 = vpack.c.bf16 %v2320, %v2314
        %v2350 = vpack.c.bf16 %v2326, %v2326
        %v2351 = vpack.c.bf16 %v2338, %v2332
        %v2352 = vpack.c.bf16 %v2344, %v2344
        %2353 = vst [vmem:[%s290] sm:$0xff] %v2345
        %2354 = vst [vmem:[%s290 + $0x8] sm:$0xf] %v2346
        %2355 = vst [vmem:[%s290 + $0xc] sm:$0xff] %v2347
        %2356 = vst [vmem:[%s290 + $0x14] sm:$0xf] %v2348
        %2357 = vst [vmem:[%s290 + $0x18] sm:$0xff] %v2349
        %2358 = vst [vmem:[%s290 + $0x20] sm:$0xf] %v2350
        %2359 = vst [vmem:[%s290 + $0x24] sm:$0xff] %v2351
        %2360 = vst [vmem:[%s290 + $0x2c] sm:$0xf] %v2352
        %s2361 = sand.u32 %s120, 1
        %s2362 = scalar_lea.sflag [#allocation4], %s2361
        %s2363 = sand.u32 %s120, 1
        %s2364 = smul.addr %s2363, 48
        %s2365 = scalar_lea.vmem [#allocation10], %s2364
        // Predicated region
        $region53: #{tpu_custom_call.1} parent=35 // pred_check
          %p2366 = pneg %p130
        $region54: #{tpu_custom_call.1} parent=35 // pred_check_branch
          %2368 = sbr.rel (%p2366) target = $region56
        $region55: #{tpu_custom_call.1} parent=35 // pred_region
          %s2369 = smul.u32 4, %s23
          %2371 = vsyncadd %s2362, 0
          %s2372 = smul.addr %s2369, 3
          %s2373 = smul.addr %s2372, 4
          %s2374 = scalar_lea.hbm %s4, %s2373
          %s2375 = sshll.u32 %s2365, 4
          %s2376 = int_to_ptr.vmem [resolvable:$true] %s2375
          %s2377 = sshll.u32 %s2374, 4
          %s2378 = int_to_ptr.hbm [resolvable:$true] %s2377
          %2383 = dma.vmem_to_hbm [thread:$0]  %s2376, 768, %s2378, %s2362, 192, 192, 12
        $region56: #{tpu_custom_call.1} parent=35 // pred_fallthru
          _
      $region36: #{tpu_custom_call.1} parent=5 // pred_fallthru
        _
      %p2384 = scmp.le.s32.totalorder 2, %s18
      // Predicated region
      $region57: #{tpu_custom_call.1} parent=5 // pred_check
        %p2385 = pneg %p2384
      $region58: #{tpu_custom_call.1} parent=5 // pred_check_branch
        %2387 = sbr.rel (%p2385) target = $region60
      $region59: #{tpu_custom_call.1} parent=5 // pred_region
        %s2388 = ssub.s32 %s18, 2
        // Predicated region
        $region61: #{tpu_custom_call.1} parent=59 // pred_check
          %p2389 = pneg %p136
        $region62: #{tpu_custom_call.1} parent=59 // pred_check_branch
          %2391 = sbr.rel (%p2389) target = $region64
        $region63: #{tpu_custom_call.1} parent=59 // pred_region
          %s2392 = sand.u32 %s121, 1
          %s2393 = scalar_lea.sflag [#allocation4], %s2392
          %s2394 = sand.u32 %s121, 1
          %s2395 = smul.addr %s2394, 48
          %s2396 = scalar_lea.vmem [#allocation10], %s2395
          %2398 = dma.done %s2393, 768
        $region64: #{tpu_custom_call.1} parent=59 // pred_fallthru
          _
      $region60: #{tpu_custom_call.1} parent=5 // pred_fallthru
        _
    $region6: #{tpu_custom_call.1} parent=1 // loop_footer
      %s22 = sadd.s32 1, %s18
    $region7: #{tpu_custom_call.1} parent=1 // loop_footer_branch
      %17 = sbr.rel target = $region3
    $region8: #{tpu_custom_call.1} parent=1 // loop_exit
      _
    %2399 = vsyncpa [#allocation3], 1
    %s2400 = scalar_lea.sflag [#allocation3], 1
    %2401 = vsyncpa %s2400, 1
    %2402 = vsyncpa [#allocation6], 1
    %2403 = vsyncpa [#allocation9], 1
    %2404 = vsyncpa [#allocation4], 1
    %s2405 = scalar_lea.sflag [#allocation4], 1
    %2406 = vsyncpa %s2405, 1

</llo_original>
